<compile_context>
chip_gen: v7x
topology: tpu7x:2x2x1
jax: 0.10.0
libtpu: 0.0.40
codegen_flags: <defaults>
</compile_context>

<pallas_src>
import jax
import jax.numpy as jnp
from jax.experimental import pallas as pl
from jax.experimental.pallas import tpu as pltpu


def _round_up(x: int, m: int) -> int:
    return ((x + m - 1) // m) * m


def _mf_kernel(pid_ref, sid_ref, p_tab_ref, s_tab_ref, out_ref):
    """One grid step = TB (playlist_id, song_id) pairs.

    pid_ref / sid_ref : (1, TB) int32 id blocks (VMEM).
    p_tab_ref         : (D_pad, Np_pad) pre-transposed playlist table, resident in VMEM.
    s_tab_ref         : (D_pad, Ns_pad) pre-transposed song table, resident in VMEM.
    out_ref           : (1, TB) lane-dense block of dot products for this step.
    """
    pids = pid_ref[...]                     # (1, TB)
    sids = sid_ref[...]                     # (1, TB)
    d_pad, np_pad = p_tab_ref.shape
    ns_pad = s_tab_ref.shape[1]
    tb = pids.shape[1]

    # One-hot gather masks, (N_pad, TB): column j selects table row id_j.
    oh_p = (jax.lax.broadcasted_iota(jnp.int32, (np_pad, tb), 0) == pids).astype(jnp.float32)
    oh_s = (jax.lax.broadcasted_iota(jnp.int32, (ns_pad, tb), 0) == sids).astype(jnp.float32)

    # MXU gathers: (D_pad, N_pad) @ (N_pad, TB) -> (D_pad, TB); column j == table[id_j, :].
    p_g = jnp.dot(p_tab_ref[...], oh_p,
                  preferred_element_type=jnp.float32,
                  precision=jax.lax.Precision.HIGHEST)
    s_g = jnp.dot(s_tab_ref[...], oh_s,
                  preferred_element_type=jnp.float32,
                  precision=jax.lax.Precision.HIGHEST)

    # Elementwise product + sublane reduce over the embedding dim -> dense (1, TB) lane row.
    out_ref[...] = jnp.sum(p_g * s_g, axis=0, keepdims=True)


def matrix_factorization_forward(playlist_ids, song_ids, playlist_emb, song_emb, *, tb=512):
    """Pallas equivalent of MatrixFactorization.forward.

    playlist_ids : (B,)  integer ids
    song_ids     : (B,)  integer ids
    playlist_emb : (num_playlists, D) float32
    song_emb     : (num_songs, D)     float32
    returns      : (B,) float32 == (playlist_emb[pids] * song_emb[sids]).sum(-1)
    """
    B = playlist_ids.shape[0]
    num_playlists, D = playlist_emb.shape
    num_songs, D2 = song_emb.shape
    assert D == D2, "embedding dims must match"

    # Bounds safety: clamp ids so a bad id can never select outside its table.
    # (Semantic difference: PyTorch nn.Embedding raises on out-of-range ids.)
    pids = jnp.clip(playlist_ids.astype(jnp.int32), 0, num_playlists - 1)
    sids = jnp.clip(song_ids.astype(jnp.int32), 0, num_songs - 1)

    # Effective per-step tile: lane-aligned, no bigger than the padded batch, and split into
    # >=2 grid blocks when the batch allows so both v7x TensorCores get work.
    b_aligned = _round_up(max(B, 1), 128)
    tb_eff = min(tb, b_aligned)
    if b_aligned // tb_eff < 2 and b_aligned >= 256:
        tb_eff = _round_up((b_aligned + 1) // 2, 128)
    b_pad = _round_up(b_aligned, tb_eff)
    n_blocks = b_pad // tb_eff

    if b_pad != B:
        pids = jnp.pad(pids, (0, b_pad - B))   # padded pairs gather row 0 (valid), sliced off
        sids = jnp.pad(sids, (0, b_pad - B))
    pids2d = pids.reshape(1, b_pad)
    sids2d = sids.reshape(1, b_pad)

    # Pre-transposed, padded tables: (D_pad, N_pad).  Sublane dim (D) -> multiple of 8,
    # lane dim (N) -> multiple of 128.  Zero padding never contributes to the dot products.
    d_pad = _round_up(D, 8)
    np_pad = _round_up(num_playlists, 128)
    ns_pad = _round_up(num_songs, 128)
    p_tab_t = jnp.pad(playlist_emb.astype(jnp.float32).T,
                      ((0, d_pad - D), (0, np_pad - num_playlists)))
    s_tab_t = jnp.pad(song_emb.astype(jnp.float32).T,
                      ((0, d_pad - D), (0, ns_pad - num_songs)))

    # VMEM budget (resident tables dominate; v7x tops out at 64 MiB physical).
    table_bytes = 4 * (int(p_tab_t.size) + int(s_tab_t.size))
    block_bytes = 4 * tb_eff * (np_pad + ns_pad + 2 * d_pad + 8)
    vmem_limit = int(2 * table_bytes + 4 * block_bytes + (4 << 20))
    vmem_limit = max(min(vmem_limit, 64 << 20), 16 << 20)

    out = pl.pallas_call(
        _mf_kernel,
        out_shape=jax.ShapeDtypeStruct((1, b_pad), jnp.float32),
        grid_spec=pltpu.PrefetchScalarGridSpec(
            num_scalar_prefetch=0,
            grid=(n_blocks,),
            in_specs=[
                pl.BlockSpec((1, tb_eff), lambda i: (0, i)),      # playlist ids (per step)
                pl.BlockSpec((1, tb_eff), lambda i: (0, i)),      # song ids     (per step)
                pl.BlockSpec((d_pad, np_pad), lambda i: (0, 0)),  # playlist table (resident)
                pl.BlockSpec((d_pad, ns_pad), lambda i: (0, 0)),  # song table     (resident)
            ],
            out_specs=pl.BlockSpec((1, tb_eff), lambda i: (0, i)),
        ),
        compiler_params=pltpu.CompilerParams(
            # Independent batch blocks -> shard across TensorCores on v7x; neutral elsewhere.
            dimension_semantics=("parallel",),
            vmem_limit_bytes=vmem_limit,
        ),
    )(pids2d, sids2d, p_tab_t, s_tab_t)

    return out[0, :B]


if __name__ == "__main__":
    # Small, deterministic problem sizes.
    num_playlists = 64
    num_songs = 96
    embedding_dim = 128   # lane-aligned embedding width
    batch = 8

    key = jax.random.PRNGKey(0)
    k_p, k_s, k_pid, k_sid = jax.random.split(key, 4)

    # Deterministic "nn.Embedding" weight init (N(0,1), float32 — PyTorch default).
    playlist_emb = jax.random.normal(k_p, (num_playlists, embedding_dim), dtype=jnp.float32)
    song_emb = jax.random.normal(k_s, (num_songs, embedding_dim), dtype=jnp.float32)

    playlist_ids = jax.random.randint(k_pid, (batch,), 0, num_playlists, dtype=jnp.int32)
    song_ids = jax.random.randint(k_sid, (batch,), 0, num_songs, dtype=jnp.int32)

    result = matrix_factorization_forward(playlist_ids, song_ids, playlist_emb, song_emb)
    result = jax.block_until_ready(result)

    # Pure-JAX reference check of the forward semantics.
    ref = jnp.sum(playlist_emb[playlist_ids] * song_emb[song_ids], axis=1)
    assert result.shape == (batch,)
    assert jnp.allclose(result, ref, atol=1e-4, rtol=1e-4)

    print("KERNEL_OK")
</pallas_src>

<mosaic_0001>
module attributes {stable_mosaic.version = 11 : i64} {
  func.func @_mf_kernel(%arg0: i32, %arg1: memref<1x128xi32, #tpu.memory_space<vmem>>, %arg2: memref<1x128xi32, #tpu.memory_space<vmem>>, %arg3: memref<128x128xf32, #tpu.memory_space<vmem>>, %arg4: memref<128x128xf32, #tpu.memory_space<vmem>>, %arg5: memref<1x128xf32, #tpu.memory_space<vmem>>) attributes {dimension_semantics = [#tpu.dimension_semantics<parallel>], iteration_bounds = array<i64: 1>, scalar_prefetch = 0 : i64, scratch_operands = 0 : i64, tpu.core_type = #tpu.core_type<tc>, window_params = [{transform_indices = @transform_0, window_bounds = array<i64: 1, 128>}, {transform_indices = @transform_1, window_bounds = array<i64: 1, 128>}, {pipeline_mode = #tpu.pipeline_mode<synchronous>, transform_indices = @transform_2, window_bounds = array<i64: 128, 128>}, {pipeline_mode = #tpu.pipeline_mode<synchronous>, transform_indices = @transform_3, window_bounds = array<i64: 128, 128>}, {transform_indices = @transform_4, window_bounds = array<i64: 1, 128>}]} {
    %c0 = arith.constant 0 : index
    %c0_0 = arith.constant 0 : index
    %0 = vector.load %arg1[%c0, %c0_0] : memref<1x128xi32, #tpu.memory_space<vmem>>, vector<1x128xi32>
    %c0_1 = arith.constant 0 : index
    %c0_2 = arith.constant 0 : index
    %1 = vector.load %arg2[%c0_1, %c0_2] : memref<1x128xi32, #tpu.memory_space<vmem>>, vector<1x128xi32>
    %2 = tpu.iota {dimensions = array<i32: 0>} : vector<128x128xi32>
    %3 = vector.broadcast %0 : vector<1x128xi32> to vector<128x128xi32>
    %4 = arith.cmpi eq, %2, %3 : vector<128x128xi32>
    %5 = arith.extui %4 : vector<128x128xi1> to vector<128x128xi32>
    %6 = arith.sitofp %5 : vector<128x128xi32> to vector<128x128xf32>
    %7 = tpu.iota {dimensions = array<i32: 0>} : vector<128x128xi32>
    %8 = vector.broadcast %1 : vector<1x128xi32> to vector<128x128xi32>
    %9 = arith.cmpi eq, %7, %8 : vector<128x128xi32>
    %10 = arith.extui %9 : vector<128x128xi1> to vector<128x128xi32>
    %11 = arith.sitofp %10 : vector<128x128xi32> to vector<128x128xf32>
    %c0_3 = arith.constant 0 : index
    %c0_4 = arith.constant 0 : index
    %12 = vector.load %arg3[%c0_3, %c0_4] : memref<128x128xf32, #tpu.memory_space<vmem>>, vector<128x128xf32>
    %cst = arith.constant dense<0.000000e+00> : vector<128x128xf32>
    %13 = tpu.matmul %12, %6, %cst {dimension_numbers = #tpu.dot_dimension_numbers<[1], [0], [0], [1], [0, 0, 1, 1], [], []>, precision = #tpu.contract_precision<fp32>} : vector<128x128xf32>, vector<128x128xf32>, vector<128x128xf32> -> vector<128x128xf32>
    %c0_5 = arith.constant 0 : index
    %c0_6 = arith.constant 0 : index
    %14 = vector.load %arg4[%c0_5, %c0_6] : memref<128x128xf32, #tpu.memory_space<vmem>>, vector<128x128xf32>
    %cst_7 = arith.constant dense<0.000000e+00> : vector<128x128xf32>
    %15 = tpu.matmul %14, %11, %cst_7 {dimension_numbers = #tpu.dot_dimension_numbers<[1], [0], [0], [1], [0, 0, 1, 1], [], []>, precision = #tpu.contract_precision<fp32>} : vector<128x128xf32>, vector<128x128xf32>, vector<128x128xf32> -> vector<128x128xf32>
    %16 = arith.mulf %13, %15 : vector<128x128xf32>
    %cst_8 = arith.constant dense<0.000000e+00> : vector<128xf32>
    %17 = vector.multi_reduction <add>, %16, %cst_8 [0] : vector<128x128xf32> to vector<128xf32>
    %18 = vector.shape_cast %17 : vector<128xf32> to vector<1x128xf32>
    %c0_9 = arith.constant 0 : index
    %c0_10 = arith.constant 0 : index
    %19 = vector.load %arg5[%c0_9, %c0_10] : memref<1x128xf32, #tpu.memory_space<vmem>>, vector<1x128xf32>
    tpu.vector_store %arg5[%c0_9, %c0_10], %18 {strides = array<i32>} : memref<1x128xf32, #tpu.memory_space<vmem>>, vector<1x128xf32>,
    return
  }
  func.func @transform_0(%arg0: i32) -> (i32, i32) {
    %c0_i32 = arith.constant 0 : i32
    %c0_i32_0 = arith.constant 0 : i32
    return %c0_i32, %arg0 : i32, i32
  }
  func.func @transform_1(%arg0: i32) -> (i32, i32) {
    %c0_i32 = arith.constant 0 : i32
    %c0_i32_0 = arith.constant 0 : i32
    return %c0_i32, %arg0 : i32, i32
  }
  func.func @transform_2(%arg0: i32) -> (i32, i32) {
    %c0_i32 = arith.constant 0 : i32
    %c0_i32_0 = arith.constant 0 : i32
    %c0_i32_1 = arith.constant 0 : i32
    return %c0_i32, %c0_i32_0 : i32, i32
  }
  func.func @transform_3(%arg0: i32) -> (i32, i32) {
    %c0_i32 = arith.constant 0 : i32
    %c0_i32_0 = arith.constant 0 : i32
    %c0_i32_1 = arith.constant 0 : i32
    return %c0_i32, %c0_i32_0 : i32, i32
  }
  func.func @transform_4(%arg0: i32) -> (i32, i32) {
    %c0_i32 = arith.constant 0 : i32
    %c0_i32_0 = arith.constant 0 : i32
    return %c0_i32, %arg0 : i32, i32
  }
}

</mosaic_0001>

<llo_original>
// kernel: tpu_custom_call.1
$region0: #{tpu_custom_call.1}
  #allocation0 [shape = 'u32[]', space=smem, size = 0x4, offset = 0x4, fixed_abs, tag = 'smem constant byte address 0x4 - core index']
  #allocation1 [shape = 'u32[144,128]{1,0:T(1,128)}', space=vmem, size = 0x12000, scoped, tag = 'internal scratch']
  %s0 = inlined_call_operand.hbm [shape: s32[1,128], index: 0, kind: input, shape index: {}]
  %s1 = inlined_call_operand.vmem [shape: s32[1,128], index: 1, kind: input, shape index: {}]
  %s2 = inlined_call_operand.hbm [shape: f32[128,128], index: 2, kind: input, shape index: {}]
  %s3 = inlined_call_operand.hbm [shape: f32[128,128], index: 3, kind: input, shape index: {}]
  %s4 = inlined_call_operand.hbm [shape: f32[1,128], index: 4, kind: output, shape index: {}]
  %s5 = sld [smem:[#allocation0]]
  $region38: #{tpu_custom_call.1} parent=0
    _
  %s7 = ssub.s32 1, %s5
  %s8 = scalar_select 0, %s7, %s5
  $region1: #{tpu_custom_call.1} parent=0
    #allocation2 [shape = 'u8[512]{0}', space=vmem, size = 0x400, scoped, tag = 'input window, operand 0, single buffered']
    #allocation3 [shape = 's32[1]{0}', space=sflag, size = 0x4, scoped, tag = 'scoped memory for tpu_custom_call.1']
    #allocation4 [shape = 's32[1]{0}', space=sflag, size = 0x4, scoped, tag = 'scoped memory for tpu_custom_call.1']
    #allocation5 [shape = 'u8[65536]{0}', space=vmem, size = 0x10000, scoped, tag = 'input window, operand 2, single buffered']
    #allocation6 [shape = 's32[1]{0}', space=sflag, size = 0x4, scoped, tag = 'scoped memory for tpu_custom_call.1']
    #allocation7 [shape = 'u8[65536]{0}', space=vmem, size = 0x10000, scoped, tag = 'input window, operand 3, single buffered']
    #allocation8 [shape = 'u8[512]{0}', space=vmem, size = 0x400, scoped, tag = 'output window, operand 0, single buffered']
    %9 = vsyncpa [#allocation3], 0
    %10 = vsyncpa [#allocation6], 0
    %11 = vsyncpa [#allocation4], 0
    // Predicated region
    $region2: #{tpu_custom_call.1} parent=1 // pred_check
      _
    $region3: #{tpu_custom_call.1} parent=1 // pred_check_branch
      %13 = sbr.rel (0) target = $region5
    $region4: #{tpu_custom_call.1} parent=1 // pred_region
      %s15 = ssub.s32 16, 16
      %16 = vsyncadd [#allocation3], %s15
      %s18 = sshll.u32 [#allocation2], 4
      %s19 = int_to_ptr.vmem [resolvable:$true] %s18
      %21 = dma.hbm_to_vmem [thread:$0]  %s0, 16, %s19, [#allocation3]
    $region5: #{tpu_custom_call.1} parent=1 // pred_fallthru
      _
    // Predicated region
    $region6: #{tpu_custom_call.1} parent=1 // pred_check
      _
    $region7: #{tpu_custom_call.1} parent=1 // pred_check_branch
      %23 = sbr.rel (0) target = $region9
    $region8: #{tpu_custom_call.1} parent=1 // pred_region
      _
    $region9: #{tpu_custom_call.1} parent=1 // pred_fallthru
      _
    // Predicated region
    $region10: #{tpu_custom_call.1} parent=1 // pred_check
      _
    $region11: #{tpu_custom_call.1} parent=1 // pred_check_branch
      %25 = sbr.rel (0) target = $region13
    $region12: #{tpu_custom_call.1} parent=1 // pred_region
      %s27 = ssub.s32 2048, 2048
      %28 = vsyncadd [#allocation6], %s27
      %s29 = sshll.u32 [#allocation5], 4
      %s30 = int_to_ptr.vmem [resolvable:$true] %s29
      %35 = dma.hbm_to_vmem [thread:$0]  %s2, 2048, %s30, [#allocation6], 128, 128, 8
    $region13: #{tpu_custom_call.1} parent=1 // pred_fallthru
      _
    // Predicated region
    $region14: #{tpu_custom_call.1} parent=1 // pred_check
      _
    $region15: #{tpu_custom_call.1} parent=1 // pred_check_branch
      %37 = sbr.rel (0) target = $region17
    $region16: #{tpu_custom_call.1} parent=1 // pred_region
      %s39 = ssub.s32 2048, 2048
      %40 = vsyncadd [#allocation6], %s39
      %s41 = sshll.u32 [#allocation7], 4
      %s42 = int_to_ptr.vmem [resolvable:$true] %s41
      %47 = dma.hbm_to_vmem [thread:$0]  %s3, 2048, %s42, [#allocation6], 128, 128, 8
    $region17: #{tpu_custom_call.1} parent=1 // pred_fallthru
      _
    // Predicated region
    $region18: #{tpu_custom_call.1} parent=1 // pred_check
      _
    $region19: #{tpu_custom_call.1} parent=1 // pred_check_branch
      %49 = sbr.rel (0) target = $region21
    $region20: #{tpu_custom_call.1} parent=1 // pred_region
      %50 = dma.done [#allocation3], 16
    $region21: #{tpu_custom_call.1} parent=1 // pred_fallthru
      _
    // Predicated region
    $region22: #{tpu_custom_call.1} parent=1 // pred_check
      _
    $region23: #{tpu_custom_call.1} parent=1 // pred_check_branch
      %52 = sbr.rel (0) target = $region25
    $region24: #{tpu_custom_call.1} parent=1 // pred_region
      %53 = dma.done [#allocation6], 2048
    $region25: #{tpu_custom_call.1} parent=1 // pred_fallthru
      _
    // Predicated region
    $region26: #{tpu_custom_call.1} parent=1 // pred_check
      _
    $region27: #{tpu_custom_call.1} parent=1 // pred_check_branch
      %55 = sbr.rel (0) target = $region29
    $region28: #{tpu_custom_call.1} parent=1 // pred_region
      %56 = dma.done [#allocation6], 2048
    $region29: #{tpu_custom_call.1} parent=1 // pred_fallthru
      _
    %v57 = vld [vmem:[#allocation2] sm:$0x1]
    %v58 = vld [vmem:[%s1] sm:$0x1]
    %v59 = vlaneseq
    %v60 = vshrl.u32 %v59, 7
    %v61 = vadd.s32 %v60, 8
    %v62 = vadd.s32 %v60, 16
    %v63 = vadd.s32 %v60, 24
    %v64 = vadd.s32 %v60, 32
    %v65 = vadd.s32 %v60, 40
    %v66 = vadd.s32 %v60, 48
    %v67 = vadd.s32 %v60, 56
    %v68 = vadd.s32 %v60, 64
    %v69 = vadd.s32 %v60, 72
    %v70 = vadd.s32 %v60, 80
    %v71 = vadd.s32 %v60, 88
    %v72 = vadd.s32 %v60, 96
    %v73 = vadd.s32 %v60, 104
    %v74 = vadd.s32 %v60, 112
    %v75 = vadd.s32 %v60, 120
    %v76 = vlaneseq
    %v77 = vshrl.u32 %v76, 7
    %v78 = vsub.s32 0, %v77
    %v79 = vrot.slane %v57, %v78
    %vm80 = vcmp.eq.s32.totalorder %v60, %v79
    %vm81 = vcmp.eq.s32.totalorder %v61, %v79
    %vm82 = vcmp.eq.s32.totalorder %v62, %v79
    %vm83 = vcmp.eq.s32.totalorder %v63, %v79
    %vm84 = vcmp.eq.s32.totalorder %v64, %v79
    %vm85 = vcmp.eq.s32.totalorder %v65, %v79
    %vm86 = vcmp.eq.s32.totalorder %v66, %v79
    %vm87 = vcmp.eq.s32.totalorder %v67, %v79
    %vm88 = vcmp.eq.s32.totalorder %v68, %v79
    %vm89 = vcmp.eq.s32.totalorder %v69, %v79
    %vm90 = vcmp.eq.s32.totalorder %v70, %v79
    %vm91 = vcmp.eq.s32.totalorder %v71, %v79
    %vm92 = vcmp.eq.s32.totalorder %v72, %v79
    %vm93 = vcmp.eq.s32.totalorder %v73, %v79
    %vm94 = vcmp.eq.s32.totalorder %v74, %v79
    %vm95 = vcmp.eq.s32.totalorder %v75, %v79
    %v96 = vsel %vm80, 1, 0
    %v97 = vsel %vm81, 1, 0
    %v98 = vsel %vm82, 1, 0
    %v99 = vsel %vm83, 1, 0
    %v100 = vsel %vm84, 1, 0
    %v101 = vsel %vm85, 1, 0
    %v102 = vsel %vm86, 1, 0
    %v103 = vsel %vm87, 1, 0
    %v104 = vsel %vm88, 1, 0
    %v105 = vsel %vm89, 1, 0
    %v106 = vsel %vm90, 1, 0
    %v107 = vsel %vm91, 1, 0
    %v108 = vsel %vm92, 1, 0
    %v109 = vsel %vm93, 1, 0
    %v110 = vsel %vm94, 1, 0
    %v111 = vsel %vm95, 1, 0
    %v112 = vcvt.s32.f32 %v96
    %v113 = vcvt.s32.f32 %v97
    %v114 = vcvt.s32.f32 %v98
    %v115 = vcvt.s32.f32 %v99
    %v116 = vcvt.s32.f32 %v100
    %v117 = vcvt.s32.f32 %v101
    %v118 = vcvt.s32.f32 %v102
    %v119 = vcvt.s32.f32 %v103
    %v120 = vcvt.s32.f32 %v104
    %v121 = vcvt.s32.f32 %v105
    %v122 = vcvt.s32.f32 %v106
    %v123 = vcvt.s32.f32 %v107
    %v124 = vcvt.s32.f32 %v108
    %v125 = vcvt.s32.f32 %v109
    %v126 = vcvt.s32.f32 %v110
    %v127 = vcvt.s32.f32 %v111
    %v128 = vlaneseq
    %v129 = vshrl.u32 %v128, 7
    %v130 = vsub.s32 0, %v129
    %v131 = vrot.slane %v58, %v130
    %vm132 = vcmp.eq.s32.totalorder %v60, %v131
    %vm133 = vcmp.eq.s32.totalorder %v61, %v131
    %vm134 = vcmp.eq.s32.totalorder %v62, %v131
    %vm135 = vcmp.eq.s32.totalorder %v63, %v131
    %vm136 = vcmp.eq.s32.totalorder %v64, %v131
    %vm137 = vcmp.eq.s32.totalorder %v65, %v131
    %vm138 = vcmp.eq.s32.totalorder %v66, %v131
    %vm139 = vcmp.eq.s32.totalorder %v67, %v131
    %vm140 = vcmp.eq.s32.totalorder %v68, %v131
    %vm141 = vcmp.eq.s32.totalorder %v69, %v131
    %vm142 = vcmp.eq.s32.totalorder %v70, %v131
    %vm143 = vcmp.eq.s32.totalorder %v71, %v131
    %vm144 = vcmp.eq.s32.totalorder %v72, %v131
    %vm145 = vcmp.eq.s32.totalorder %v73, %v131
    %vm146 = vcmp.eq.s32.totalorder %v74, %v131
    %vm147 = vcmp.eq.s32.totalorder %v75, %v131
    %v148 = vsel %vm132, 1, 0
    %v149 = vsel %vm133, 1, 0
    %v150 = vsel %vm134, 1, 0
    %v151 = vsel %vm135, 1, 0
    %v152 = vsel %vm136, 1, 0
    %v153 = vsel %vm137, 1, 0
    %v154 = vsel %vm138, 1, 0
    %v155 = vsel %vm139, 1, 0
    %v156 = vsel %vm140, 1, 0
    %v157 = vsel %vm141, 1, 0
    %v158 = vsel %vm142, 1, 0
    %v159 = vsel %vm143, 1, 0
    %v160 = vsel %vm144, 1, 0
    %v161 = vsel %vm145, 1, 0
    %v162 = vsel %vm146, 1, 0
    %v163 = vsel %vm147, 1, 0
    %v164 = vcvt.s32.f32 %v148
    %v165 = vcvt.s32.f32 %v149
    %v166 = vcvt.s32.f32 %v150
    %v167 = vcvt.s32.f32 %v151
    %v168 = vcvt.s32.f32 %v152
    %v169 = vcvt.s32.f32 %v153
    %v170 = vcvt.s32.f32 %v154
    %v171 = vcvt.s32.f32 %v155
    %v172 = vcvt.s32.f32 %v156
    %v173 = vcvt.s32.f32 %v157
    %v174 = vcvt.s32.f32 %v158
    %v175 = vcvt.s32.f32 %v159
    %v176 = vcvt.s32.f32 %v160
    %v177 = vcvt.s32.f32 %v161
    %v178 = vcvt.s32.f32 %v162
    %v179 = vcvt.s32.f32 %v163
    %v180 = vld [vmem:[#allocation5] sm:$0xff]
    %v181 = vld [vmem:[#allocation5 + $0x8] sm:$0xff]
    %v182 = vld [vmem:[#allocation5 + $0x10] sm:$0xff]
    %v183 = vld [vmem:[#allocation5 + $0x18] sm:$0xff]
    %v184 = vld [vmem:[#allocation5 + $0x20] sm:$0xff]
    %v185 = vld [vmem:[#allocation5 + $0x28] sm:$0xff]
    %v186 = vld [vmem:[#allocation5 + $0x30] sm:$0xff]
    %v187 = vld [vmem:[#allocation5 + $0x38] sm:$0xff]
    %v188 = vld [vmem:[#allocation5 + $0x40] sm:$0xff]
    %v189 = vld [vmem:[#allocation5 + $0x48] sm:$0xff]
    %v190 = vld [vmem:[#allocation5 + $0x50] sm:$0xff]
    %v191 = vld [vmem:[#allocation5 + $0x58] sm:$0xff]
    %v192 = vld [vmem:[#allocation5 + $0x60] sm:$0xff]
    %v193 = vld [vmem:[#allocation5 + $0x68] sm:$0xff]
    %v194 = vld [vmem:[#allocation5 + $0x70] sm:$0xff]
    %v195 = vld [vmem:[#allocation5 + $0x78] sm:$0xff]
    %196 = vmatprep.subr.mxu0 0.0
    %v197 = vand.u32 %v112, 4294901760
    %198 = vmatpush1.msra.mxu0 %v197
    %199 = vmatprep.subr.mxu0 0.0
    %v200 = vand.u32 %v113, 4294901760
    %201 = vmatpush1.msra.mxu0 %v200
    %202 = vmatprep.subr.mxu0 0.0
    %v203 = vand.u32 %v114, 4294901760
    %204 = vmatpush1.msra.mxu0 %v203
    %205 = vmatprep.subr.mxu0 0.0
    %v206 = vand.u32 %v115, 4294901760
    %207 = vmatpush1.msra.mxu0 %v206
    %208 = vmatprep.subr.mxu0 0.0
    %v209 = vand.u32 %v116, 4294901760
    %210 = vmatpush1.msra.mxu0 %v209
    %211 = vmatprep.subr.mxu0 0.0
    %v212 = vand.u32 %v117, 4294901760
    %213 = vmatpush1.msra.mxu0 %v212
    %214 = vmatprep.subr.mxu0 0.0
    %v215 = vand.u32 %v118, 4294901760
    %216 = vmatpush1.msra.mxu0 %v215
    %217 = vmatprep.subr.mxu0 0.0
    %v218 = vand.u32 %v119, 4294901760
    %219 = vmatpush1.msra.mxu0 %v218
    %220 = vmatprep.subr.mxu0 0.0
    %v221 = vand.u32 %v120, 4294901760
    %222 = vmatpush1.msra.mxu0 %v221
    %223 = vmatprep.subr.mxu0 0.0
    %v224 = vand.u32 %v121, 4294901760
    %225 = vmatpush1.msra.mxu0 %v224
    %226 = vmatprep.subr.mxu0 0.0
    %v227 = vand.u32 %v122, 4294901760
    %228 = vmatpush1.msra.mxu0 %v227
    %229 = vmatprep.subr.mxu0 0.0
    %v230 = vand.u32 %v123, 4294901760
    %231 = vmatpush1.msra.mxu0 %v230
    %232 = vmatprep.subr.mxu0 0.0
    %v233 = vand.u32 %v124, 4294901760
    %234 = vmatpush1.msra.mxu0 %v233
    %235 = vmatprep.subr.mxu0 0.0
    %v236 = vand.u32 %v125, 4294901760
    %237 = vmatpush1.msra.mxu0 %v236
    %238 = vmatprep.subr.mxu0 0.0
    %v239 = vand.u32 %v126, 4294901760
    %240 = vmatpush1.msra.mxu0 %v239
    %241 = vmatprep.subr.mxu0 0.0
    %v242 = vand.u32 %v127, 4294901760
    %243 = vmatpush1.msra.mxu0 %v242
    %244 = vmatprep.subr.mxu0 0.0
    %245 = vmatpush1.msra.mxu0 0.0
    %246 = vmatprep.subr.mxu0 0.0
    %247 = vmatpush1.msra.mxu0 0.0
    %248 = vmatprep.subr.mxu0 0.0
    %249 = vmatpush1.msra.mxu0 0.0
    %250 = vmatprep.subr.mxu0 0.0
    %251 = vmatpush1.msra.mxu0 0.0
    %252 = vmatprep.subr.mxu0 0.0
    %253 = vmatpush1.msra.mxu0 0.0
    %254 = vmatprep.subr.mxu0 0.0
    %255 = vmatpush1.msra.mxu0 0.0
    %256 = vmatprep.subr.mxu0 0.0
    %257 = vmatpush1.msra.mxu0 0.0
    %258 = vmatprep.subr.mxu0 0.0
    %259 = vmatpush1.msra.mxu0 0.0
    %260 = vmatprep.subr.mxu0 0.0
    %261 = vmatpush1.msra.mxu0 0.0
    %262 = vmatprep.subr.mxu0 0.0
    %263 = vmatpush1.msra.mxu0 0.0
    %264 = vmatprep.subr.mxu0 0.0
    %265 = vmatpush1.msra.mxu0 0.0
    %266 = vmatprep.subr.mxu0 0.0
    %267 = vmatpush1.msra.mxu0 0.0
    %268 = vmatprep.subr.mxu0 0.0
    %269 = vmatpush1.msra.mxu0 0.0
    %270 = vmatprep.subr.mxu0 0.0
    %271 = vmatpush1.msra.mxu0 0.0
    %272 = vmatprep.subr.mxu0 0.0
    %273 = vmatpush1.msra.mxu0 0.0
    %274 = vmatprep.subr.mxu0 0.0
    %275 = vmatpush1.msra.mxu0 0.0
    %276 = vmatprep.mubr.f32.mxu0 0.0
    %v277 = vand.u32 %v180, 4294901760
    %v278 = vsub.f32 %v180, %v277
    %v279 = vand.u32 %v278, 4294901760
    %v280 = vsub.f32 %v278, %v279
    %v281 = vand.u32 %v280, 4294901760
    %282 = vmatmul.mubr.f32.gmra.mrb[0].mxu0 %v281
    %v283 = vpop.f32.mrb[0].mxu0
    %v284 = vadd.f32 0.0, %v283
    %v285 = vpop.f32.mrb[0].mxu0
    %286 = vmatprep.mubr.f32.mxu0 0.0
    %v287 = vand.u32 %v181, 4294901760
    %v288 = vsub.f32 %v181, %v287
    %v289 = vand.u32 %v288, 4294901760
    %v290 = vsub.f32 %v288, %v289
    %v291 = vand.u32 %v290, 4294901760
    %292 = vmatmul.mubr.f32.gmra.mrb[0].mxu0 %v291
    %v293 = vpop.f32.mrb[0].mxu0
    %v294 = vadd.f32 0.0, %v293
    %v295 = vpop.f32.mrb[0].mxu0
    %296 = vmatprep.mubr.f32.mxu0 0.0
    %v297 = vand.u32 %v182, 4294901760
    %v298 = vsub.f32 %v182, %v297
    %v299 = vand.u32 %v298, 4294901760
    %v300 = vsub.f32 %v298, %v299
    %v301 = vand.u32 %v300, 4294901760
    %302 = vmatmul.mubr.f32.gmra.mrb[0].mxu0 %v301
    %v303 = vpop.f32.mrb[0].mxu0
    %v304 = vadd.f32 0.0, %v303
    %v305 = vpop.f32.mrb[0].mxu0
    %306 = vmatprep.mubr.f32.mxu0 0.0
    %v307 = vand.u32 %v183, 4294901760
    %v308 = vsub.f32 %v183, %v307
    %v309 = vand.u32 %v308, 4294901760
    %v310 = vsub.f32 %v308, %v309
    %v311 = vand.u32 %v310, 4294901760
    %312 = vmatmul.mubr.f32.gmra.mrb[0].mxu0 %v311
    %v313 = vpop.f32.mrb[0].mxu0
    %v314 = vadd.f32 0.0, %v313
    %v315 = vpop.f32.mrb[0].mxu0
    %316 = vmatprep.mubr.f32.mxu0 0.0
    %v317 = vand.u32 %v184, 4294901760
    %v318 = vsub.f32 %v184, %v317
    %v319 = vand.u32 %v318, 4294901760
    %v320 = vsub.f32 %v318, %v319
    %v321 = vand.u32 %v320, 4294901760
    %322 = vmatmul.mubr.f32.gmra.mrb[0].mxu0 %v321
    %v323 = vpop.f32.mrb[0].mxu0
    %v324 = vadd.f32 0.0, %v323
    %v325 = vpop.f32.mrb[0].mxu0
    %326 = vmatprep.mubr.f32.mxu0 0.0
    %v327 = vand.u32 %v185, 4294901760
    %v328 = vsub.f32 %v185, %v327
    %v329 = vand.u32 %v328, 4294901760
    %v330 = vsub.f32 %v328, %v329
    %v331 = vand.u32 %v330, 4294901760
    %332 = vmatmul.mubr.f32.gmra.mrb[0].mxu0 %v331
    %v333 = vpop.f32.mrb[0].mxu0
    %v334 = vadd.f32 0.0, %v333
    %v335 = vpop.f32.mrb[0].mxu0
    %336 = vmatprep.mubr.f32.mxu0 0.0
    %v337 = vand.u32 %v186, 4294901760
    %v338 = vsub.f32 %v186, %v337
    %v339 = vand.u32 %v338, 4294901760
    %v340 = vsub.f32 %v338, %v339
    %v341 = vand.u32 %v340, 4294901760
    %342 = vmatmul.mubr.f32.gmra.mrb[0].mxu0 %v341
    %v343 = vpop.f32.mrb[0].mxu0
    %v344 = vadd.f32 0.0, %v343
    %v345 = vpop.f32.mrb[0].mxu0
    %346 = vmatprep.mubr.f32.mxu0 0.0
    %v347 = vand.u32 %v187, 4294901760
    %v348 = vsub.f32 %v187, %v347
    %v349 = vand.u32 %v348, 4294901760
    %v350 = vsub.f32 %v348, %v349
    %v351 = vand.u32 %v350, 4294901760
    %352 = vmatmul.mubr.f32.gmra.mrb[0].mxu0 %v351
    %v353 = vpop.f32.mrb[0].mxu0
    %v354 = vadd.f32 0.0, %v353
    %v355 = vpop.f32.mrb[0].mxu0
    %356 = vmatprep.mubr.f32.mxu0 0.0
    %v357 = vand.u32 %v188, 4294901760
    %v358 = vsub.f32 %v188, %v357
    %v359 = vand.u32 %v358, 4294901760
    %v360 = vsub.f32 %v358, %v359
    %v361 = vand.u32 %v360, 4294901760
    %362 = vmatmul.mubr.f32.gmra.mrb[0].mxu0 %v361
    %v363 = vpop.f32.mrb[0].mxu0
    %v364 = vadd.f32 0.0, %v363
    %v365 = vpop.f32.mrb[0].mxu0
    %366 = vmatprep.mubr.f32.mxu0 0.0
    %v367 = vand.u32 %v189, 4294901760
    %v368 = vsub.f32 %v189, %v367
    %v369 = vand.u32 %v368, 4294901760
    %v370 = vsub.f32 %v368, %v369
    %v371 = vand.u32 %v370, 4294901760
    %372 = vmatmul.mubr.f32.gmra.mrb[0].mxu0 %v371
    %v373 = vpop.f32.mrb[0].mxu0
    %v374 = vadd.f32 0.0, %v373
    %v375 = vpop.f32.mrb[0].mxu0
    %376 = vmatprep.mubr.f32.mxu0 0.0
    %v377 = vand.u32 %v190, 4294901760
    %v378 = vsub.f32 %v190, %v377
    %v379 = vand.u32 %v378, 4294901760
    %v380 = vsub.f32 %v378, %v379
    %v381 = vand.u32 %v380, 4294901760
    %382 = vmatmul.mubr.f32.gmra.mrb[0].mxu0 %v381
    %v383 = vpop.f32.mrb[0].mxu0
    %v384 = vadd.f32 0.0, %v383
    %v385 = vpop.f32.mrb[0].mxu0
    %386 = vmatprep.mubr.f32.mxu0 0.0
    %v387 = vand.u32 %v191, 4294901760
    %v388 = vsub.f32 %v191, %v387
    %v389 = vand.u32 %v388, 4294901760
    %v390 = vsub.f32 %v388, %v389
    %v391 = vand.u32 %v390, 4294901760
    %392 = vmatmul.mubr.f32.gmra.mrb[0].mxu0 %v391
    %v393 = vpop.f32.mrb[0].mxu0
    %v394 = vadd.f32 0.0, %v393
    %v395 = vpop.f32.mrb[0].mxu0
    %396 = vmatprep.mubr.f32.mxu0 0.0
    %v397 = vand.u32 %v192, 4294901760
    %v398 = vsub.f32 %v192, %v397
    %v399 = vand.u32 %v398, 4294901760
    %v400 = vsub.f32 %v398, %v399
    %v401 = vand.u32 %v400, 4294901760
    %402 = vmatmul.mubr.f32.gmra.mrb[0].mxu0 %v401
    %v403 = vpop.f32.mrb[0].mxu0
    %v404 = vadd.f32 0.0, %v403
    %v405 = vpop.f32.mrb[0].mxu0
    %406 = vmatprep.mubr.f32.mxu0 0.0
    %v407 = vand.u32 %v193, 4294901760
    %v408 = vsub.f32 %v193, %v407
    %v409 = vand.u32 %v408, 4294901760
    %v410 = vsub.f32 %v408, %v409
    %v411 = vand.u32 %v410, 4294901760
    %412 = vmatmul.mubr.f32.gmra.mrb[0].mxu0 %v411
    %v413 = vpop.f32.mrb[0].mxu0
    %v414 = vadd.f32 0.0, %v413
    %v415 = vpop.f32.mrb[0].mxu0
    %416 = vmatprep.mubr.f32.mxu0 0.0
    %v417 = vand.u32 %v194, 4294901760
    %v418 = vsub.f32 %v194, %v417
    %v419 = vand.u32 %v418, 4294901760
    %v420 = vsub.f32 %v418, %v419
    %v421 = vand.u32 %v420, 4294901760
    %422 = vmatmul.mubr.f32.gmra.mrb[0].mxu0 %v421
    %v423 = vpop.f32.mrb[0].mxu0
    %v424 = vadd.f32 0.0, %v423
    %v425 = vpop.f32.mrb[0].mxu0
    %426 = vmatprep.mubr.f32.mxu0 0.0
    %v427 = vand.u32 %v195, 4294901760
    %v428 = vsub.f32 %v195, %v427
    %v429 = vand.u32 %v428, 4294901760
    %v430 = vsub.f32 %v428, %v429
    %v431 = vand.u32 %v430, 4294901760
    %432 = vmatmul.mubr.f32.gmra.mrb[0].mxu0 %v431
    %v433 = vpop.f32.mrb[0].mxu0
    %v434 = vadd.f32 0.0, %v433
    %v435 = vpop.f32.mrb[0].mxu0
    %436 = vdwg.mxu0
    %437 = vmatprep.subr.mxu0 0.0
    %v438 = vand.u32 %v112, 4294901760
    %v439 = vsub.f32 %v112, %v438
    %v440 = vand.u32 %v439, 4294901760
    %v441 = vsub.f32 %v439, %v440
    %v442 = vand.u32 %v441, 4294901760
    %443 = vmatpush1.msra.mxu0 %v442
    %444 = vmatprep.subr.mxu0 0.0
    %v445 = vand.u32 %v113, 4294901760
    %v446 = vsub.f32 %v113, %v445
    %v447 = vand.u32 %v446, 4294901760
    %v448 = vsub.f32 %v446, %v447
    %v449 = vand.u32 %v448, 4294901760
    %450 = vmatpush1.msra.mxu0 %v449
    %451 = vmatprep.subr.mxu0 0.0
    %v452 = vand.u32 %v114, 4294901760
    %v453 = vsub.f32 %v114, %v452
    %v454 = vand.u32 %v453, 4294901760
    %v455 = vsub.f32 %v453, %v454
    %v456 = vand.u32 %v455, 4294901760
    %457 = vmatpush1.msra.mxu0 %v456
    %458 = vmatprep.subr.mxu0 0.0
    %v459 = vand.u32 %v115, 4294901760
    %v460 = vsub.f32 %v115, %v459
    %v461 = vand.u32 %v460, 4294901760
    %v462 = vsub.f32 %v460, %v461
    %v463 = vand.u32 %v462, 4294901760
    %464 = vmatpush1.msra.mxu0 %v463
    %465 = vmatprep.subr.mxu0 0.0
    %v466 = vand.u32 %v116, 4294901760
    %v467 = vsub.f32 %v116, %v466
    %v468 = vand.u32 %v467, 4294901760
    %v469 = vsub.f32 %v467, %v468
    %v470 = vand.u32 %v469, 4294901760
    %471 = vmatpush1.msra.mxu0 %v470
    %472 = vmatprep.subr.mxu0 0.0
    %v473 = vand.u32 %v117, 4294901760
    %v474 = vsub.f32 %v117, %v473
    %v475 = vand.u32 %v474, 4294901760
    %v476 = vsub.f32 %v474, %v475
    %v477 = vand.u32 %v476, 4294901760
    %478 = vmatpush1.msra.mxu0 %v477
    %479 = vmatprep.subr.mxu0 0.0
    %v480 = vand.u32 %v118, 4294901760
    %v481 = vsub.f32 %v118, %v480
    %v482 = vand.u32 %v481, 4294901760
    %v483 = vsub.f32 %v481, %v482
    %v484 = vand.u32 %v483, 4294901760
    %485 = vmatpush1.msra.mxu0 %v484
    %486 = vmatprep.subr.mxu0 0.0
    %v487 = vand.u32 %v119, 4294901760
    %v488 = vsub.f32 %v119, %v487
    %v489 = vand.u32 %v488, 4294901760
    %v490 = vsub.f32 %v488, %v489
    %v491 = vand.u32 %v490, 4294901760
    %492 = vmatpush1.msra.mxu0 %v491
    %493 = vmatprep.subr.mxu0 0.0
    %v494 = vand.u32 %v120, 4294901760
    %v495 = vsub.f32 %v120, %v494
    %v496 = vand.u32 %v495, 4294901760
    %v497 = vsub.f32 %v495, %v496
    %v498 = vand.u32 %v497, 4294901760
    %499 = vmatpush1.msra.mxu0 %v498
    %500 = vmatprep.subr.mxu0 0.0
    %v501 = vand.u32 %v121, 4294901760
    %v502 = vsub.f32 %v121, %v501
    %v503 = vand.u32 %v502, 4294901760
    %v504 = vsub.f32 %v502, %v503
    %v505 = vand.u32 %v504, 4294901760
    %506 = vmatpush1.msra.mxu0 %v505
    %507 = vmatprep.subr.mxu0 0.0
    %v508 = vand.u32 %v122, 4294901760
    %v509 = vsub.f32 %v122, %v508
    %v510 = vand.u32 %v509, 4294901760
    %v511 = vsub.f32 %v509, %v510
    %v512 = vand.u32 %v511, 4294901760
    %513 = vmatpush1.msra.mxu0 %v512
    %514 = vmatprep.subr.mxu0 0.0
    %v515 = vand.u32 %v123, 4294901760
    %v516 = vsub.f32 %v123, %v515
    %v517 = vand.u32 %v516, 4294901760
    %v518 = vsub.f32 %v516, %v517
    %v519 = vand.u32 %v518, 4294901760
    %520 = vmatpush1.msra.mxu0 %v519
    %521 = vmatprep.subr.mxu0 0.0
    %v522 = vand.u32 %v124, 4294901760
    %v523 = vsub.f32 %v124, %v522
    %v524 = vand.u32 %v523, 4294901760
    %v525 = vsub.f32 %v523, %v524
    %v526 = vand.u32 %v525, 4294901760
    %527 = vmatpush1.msra.mxu0 %v526
    %528 = vmatprep.subr.mxu0 0.0
    %v529 = vand.u32 %v125, 4294901760
    %v530 = vsub.f32 %v125, %v529
    %v531 = vand.u32 %v530, 4294901760
    %v532 = vsub.f32 %v530, %v531
    %v533 = vand.u32 %v532, 4294901760
    %534 = vmatpush1.msra.mxu0 %v533
    %535 = vmatprep.subr.mxu0 0.0
    %v536 = vand.u32 %v126, 4294901760
    %v537 = vsub.f32 %v126, %v536
    %v538 = vand.u32 %v537, 4294901760
    %v539 = vsub.f32 %v537, %v538
    %v540 = vand.u32 %v539, 4294901760
    %541 = vmatpush1.msra.mxu0 %v540
    %542 = vmatprep.subr.mxu0 0.0
    %v543 = vand.u32 %v127, 4294901760
    %v544 = vsub.f32 %v127, %v543
    %v545 = vand.u32 %v544, 4294901760
    %v546 = vsub.f32 %v544, %v545
    %v547 = vand.u32 %v546, 4294901760
    %548 = vmatpush1.msra.mxu0 %v547
    %549 = vmatprep.subr.mxu0 0.0
    %550 = vmatpush1.msra.mxu0 0.0
    %551 = vmatprep.subr.mxu0 0.0
    %552 = vmatpush1.msra.mxu0 0.0
    %553 = vmatprep.subr.mxu0 0.0
    %554 = vmatpush1.msra.mxu0 0.0
    %555 = vmatprep.subr.mxu0 0.0
    %556 = vmatpush1.msra.mxu0 0.0
    %557 = vmatprep.subr.mxu0 0.0
    %558 = vmatpush1.msra.mxu0 0.0
    %559 = vmatprep.subr.mxu0 0.0
    %560 = vmatpush1.msra.mxu0 0.0
    %561 = vmatprep.subr.mxu0 0.0
    %562 = vmatpush1.msra.mxu0 0.0
    %563 = vmatprep.subr.mxu0 0.0
    %564 = vmatpush1.msra.mxu0 0.0
    %565 = vmatprep.subr.mxu0 0.0
    %566 = vmatpush1.msra.mxu0 0.0
    %567 = vmatprep.subr.mxu0 0.0
    %568 = vmatpush1.msra.mxu0 0.0
    %569 = vmatprep.subr.mxu0 0.0
    %570 = vmatpush1.msra.mxu0 0.0
    %571 = vmatprep.subr.mxu0 0.0
    %572 = vmatpush1.msra.mxu0 0.0
    %573 = vmatprep.subr.mxu0 0.0
    %574 = vmatpush1.msra.mxu0 0.0
    %575 = vmatprep.subr.mxu0 0.0
    %576 = vmatpush1.msra.mxu0 0.0
    %577 = vmatprep.subr.mxu0 0.0
    %578 = vmatpush1.msra.mxu0 0.0
    %579 = vmatprep.subr.mxu0 0.0
    %580 = vmatpush1.msra.mxu0 0.0
    %581 = vmatprep.mubr.f32.mxu0 0.0
    %v582 = vand.u32 %v180, 4294901760
    %583 = vmatmul.mubr.f32.gmra.mrb[0].mxu0 %v582
    %v584 = vpop.f32.mrb[0].mxu0
    %v585 = vadd.f32 %v284, %v584
    %v586 = vpop.f32.mrb[0].mxu0
    %587 = vmatprep.mubr.f32.mxu0 0.0
    %v588 = vand.u32 %v181, 4294901760
    %589 = vmatmul.mubr.f32.gmra.mrb[0].mxu0 %v588
    %v590 = vpop.f32.mrb[0].mxu0
    %v591 = vadd.f32 %v294, %v590
    %v592 = vpop.f32.mrb[0].mxu0
    %593 = vmatprep.mubr.f32.mxu0 0.0
    %v594 = vand.u32 %v182, 4294901760
    %595 = vmatmul.mubr.f32.gmra.mrb[0].mxu0 %v594
    %v596 = vpop.f32.mrb[0].mxu0
    %v597 = vadd.f32 %v304, %v596
    %v598 = vpop.f32.mrb[0].mxu0
    %599 = vmatprep.mubr.f32.mxu0 0.0
    %v600 = vand.u32 %v183, 4294901760
    %601 = vmatmul.mubr.f32.gmra.mrb[0].mxu0 %v600
    %v602 = vpop.f32.mrb[0].mxu0
    %v603 = vadd.f32 %v314, %v602
    %v604 = vpop.f32.mrb[0].mxu0
    %605 = vmatprep.mubr.f32.mxu0 0.0
    %v606 = vand.u32 %v184, 4294901760
    %607 = vmatmul.mubr.f32.gmra.mrb[0].mxu0 %v606
    %v608 = vpop.f32.mrb[0].mxu0
    %v609 = vadd.f32 %v324, %v608
    %v610 = vpop.f32.mrb[0].mxu0
    %611 = vmatprep.mubr.f32.mxu0 0.0
    %v612 = vand.u32 %v185, 4294901760
    %613 = vmatmul.mubr.f32.gmra.mrb[0].mxu0 %v612
    %v614 = vpop.f32.mrb[0].mxu0
    %v615 = vadd.f32 %v334, %v614
    %v616 = vpop.f32.mrb[0].mxu0
    %617 = vmatprep.mubr.f32.mxu0 0.0
    %v618 = vand.u32 %v186, 4294901760
    %619 = vmatmul.mubr.f32.gmra.mrb[0].mxu0 %v618
    %v620 = vpop.f32.mrb[0].mxu0
    %v621 = vadd.f32 %v344, %v620
    %v622 = vpop.f32.mrb[0].mxu0
    %623 = vmatprep.mubr.f32.mxu0 0.0
    %v624 = vand.u32 %v187, 4294901760
    %625 = vmatmul.mubr.f32.gmra.mrb[0].mxu0 %v624
    %v626 = vpop.f32.mrb[0].mxu0
    %v627 = vadd.f32 %v354, %v626
    %v628 = vpop.f32.mrb[0].mxu0
    %629 = vmatprep.mubr.f32.mxu0 0.0
    %v630 = vand.u32 %v188, 4294901760
    %631 = vmatmul.mubr.f32.gmra.mrb[0].mxu0 %v630
    %v632 = vpop.f32.mrb[0].mxu0
    %v633 = vadd.f32 %v364, %v632
    %v634 = vpop.f32.mrb[0].mxu0
    %635 = vmatprep.mubr.f32.mxu0 0.0
    %v636 = vand.u32 %v189, 4294901760
    %637 = vmatmul.mubr.f32.gmra.mrb[0].mxu0 %v636
    %v638 = vpop.f32.mrb[0].mxu0
    %v639 = vadd.f32 %v374, %v638
    %v640 = vpop.f32.mrb[0].mxu0
    %641 = vmatprep.mubr.f32.mxu0 0.0
    %v642 = vand.u32 %v190, 4294901760
    %643 = vmatmul.mubr.f32.gmra.mrb[0].mxu0 %v642
    %v644 = vpop.f32.mrb[0].mxu0
    %v645 = vadd.f32 %v384, %v644
    %v646 = vpop.f32.mrb[0].mxu0
    %647 = vmatprep.mubr.f32.mxu0 0.0
    %v648 = vand.u32 %v191, 4294901760
    %649 = vmatmul.mubr.f32.gmra.mrb[0].mxu0 %v648
    %v650 = vpop.f32.mrb[0].mxu0
    %v651 = vadd.f32 %v394, %v650
    %v652 = vpop.f32.mrb[0].mxu0
    %653 = vmatprep.mubr.f32.mxu0 0.0
    %v654 = vand.u32 %v192, 4294901760
    %655 = vmatmul.mubr.f32.gmra.mrb[0].mxu0 %v654
    %v656 = vpop.f32.mrb[0].mxu0
    %v657 = vadd.f32 %v404, %v656
    %v658 = vpop.f32.mrb[0].mxu0
    %659 = vmatprep.mubr.f32.mxu0 0.0
    %v660 = vand.u32 %v193, 4294901760
    %661 = vmatmul.mubr.f32.gmra.mrb[0].mxu0 %v660
    %v662 = vpop.f32.mrb[0].mxu0
    %v663 = vadd.f32 %v414, %v662
    %v664 = vpop.f32.mrb[0].mxu0
    %665 = vmatprep.mubr.f32.mxu0 0.0
    %v666 = vand.u32 %v194, 4294901760
    %667 = vmatmul.mubr.f32.gmra.mrb[0].mxu0 %v666
    %v668 = vpop.f32.mrb[0].mxu0
    %v669 = vadd.f32 %v424, %v668
    %v670 = vpop.f32.mrb[0].mxu0
    %671 = vmatprep.mubr.f32.mxu0 0.0
    %v672 = vand.u32 %v195, 4294901760
    %673 = vmatmul.mubr.f32.gmra.mrb[0].mxu0 %v672
    %v674 = vpop.f32.mrb[0].mxu0
    %v675 = vadd.f32 %v434, %v674
    %v676 = vpop.f32.mrb[0].mxu0
    %677 = vdwg.mxu0
    %678 = vmatprep.subr.mxu0 0.0
    %v679 = vand.u32 %v112, 4294901760
    %v680 = vsub.f32 %v112, %v679
    %681 = vmatpush1.msra.mxu0 %v680
    %682 = vmatprep.subr.mxu0 0.0
    %v683 = vand.u32 %v113, 4294901760
    %v684 = vsub.f32 %v113, %v683
    %685 = vmatpush1.msra.mxu0 %v684
    %686 = vmatprep.subr.mxu0 0.0
    %v687 = vand.u32 %v114, 4294901760
    %v688 = vsub.f32 %v114, %v687
    %689 = vmatpush1.msra.mxu0 %v688
    %690 = vmatprep.subr.mxu0 0.0
    %v691 = vand.u32 %v115, 4294901760
    %v692 = vsub.f32 %v115, %v691
    %693 = vmatpush1.msra.mxu0 %v692
    %694 = vmatprep.subr.mxu0 0.0
    %v695 = vand.u32 %v116, 4294901760
    %v696 = vsub.f32 %v116, %v695
    %697 = vmatpush1.msra.mxu0 %v696
    %698 = vmatprep.subr.mxu0 0.0
    %v699 = vand.u32 %v117, 4294901760
    %v700 = vsub.f32 %v117, %v699
    %701 = vmatpush1.msra.mxu0 %v700
    %702 = vmatprep.subr.mxu0 0.0
    %v703 = vand.u32 %v118, 4294901760
    %v704 = vsub.f32 %v118, %v703
    %705 = vmatpush1.msra.mxu0 %v704
    %706 = vmatprep.subr.mxu0 0.0
    %v707 = vand.u32 %v119, 4294901760
    %v708 = vsub.f32 %v119, %v707
    %709 = vmatpush1.msra.mxu0 %v708
    %710 = vmatprep.subr.mxu0 0.0
    %v711 = vand.u32 %v120, 4294901760
    %v712 = vsub.f32 %v120, %v711
    %713 = vmatpush1.msra.mxu0 %v712
    %714 = vmatprep.subr.mxu0 0.0
    %v715 = vand.u32 %v121, 4294901760
    %v716 = vsub.f32 %v121, %v715
    %717 = vmatpush1.msra.mxu0 %v716
    %718 = vmatprep.subr.mxu0 0.0
    %v719 = vand.u32 %v122, 4294901760
    %v720 = vsub.f32 %v122, %v719
    %721 = vmatpush1.msra.mxu0 %v720
    %722 = vmatprep.subr.mxu0 0.0
    %v723 = vand.u32 %v123, 4294901760
    %v724 = vsub.f32 %v123, %v723
    %725 = vmatpush1.msra.mxu0 %v724
    %726 = vmatprep.subr.mxu0 0.0
    %v727 = vand.u32 %v124, 4294901760
    %v728 = vsub.f32 %v124, %v727
    %729 = vmatpush1.msra.mxu0 %v728
    %730 = vmatprep.subr.mxu0 0.0
    %v731 = vand.u32 %v125, 4294901760
    %v732 = vsub.f32 %v125, %v731
    %733 = vmatpush1.msra.mxu0 %v732
    %734 = vmatprep.subr.mxu0 0.0
    %v735 = vand.u32 %v126, 4294901760
    %v736 = vsub.f32 %v126, %v735
    %737 = vmatpush1.msra.mxu0 %v736
    %738 = vmatprep.subr.mxu0 0.0
    %v739 = vand.u32 %v127, 4294901760
    %v740 = vsub.f32 %v127, %v739
    %741 = vmatpush1.msra.mxu0 %v740
    %742 = vmatprep.subr.mxu0 0.0
    %743 = vmatpush1.msra.mxu0 0.0
    %744 = vmatprep.subr.mxu0 0.0
    %745 = vmatpush1.msra.mxu0 0.0
    %746 = vmatprep.subr.mxu0 0.0
    %747 = vmatpush1.msra.mxu0 0.0
    %748 = vmatprep.subr.mxu0 0.0
    %749 = vmatpush1.msra.mxu0 0.0
    %750 = vmatprep.subr.mxu0 0.0
    %751 = vmatpush1.msra.mxu0 0.0
    %752 = vmatprep.subr.mxu0 0.0
    %753 = vmatpush1.msra.mxu0 0.0
    %754 = vmatprep.subr.mxu0 0.0
    %755 = vmatpush1.msra.mxu0 0.0
    %756 = vmatprep.subr.mxu0 0.0
    %757 = vmatpush1.msra.mxu0 0.0
    %758 = vmatprep.subr.mxu0 0.0
    %759 = vmatpush1.msra.mxu0 0.0
    %760 = vmatprep.subr.mxu0 0.0
    %761 = vmatpush1.msra.mxu0 0.0
    %762 = vmatprep.subr.mxu0 0.0
    %763 = vmatpush1.msra.mxu0 0.0
    %764 = vmatprep.subr.mxu0 0.0
    %765 = vmatpush1.msra.mxu0 0.0
    %766 = vmatprep.subr.mxu0 0.0
    %767 = vmatpush1.msra.mxu0 0.0
    %768 = vmatprep.subr.mxu0 0.0
    %769 = vmatpush1.msra.mxu0 0.0
    %770 = vmatprep.subr.mxu0 0.0
    %771 = vmatpush1.msra.mxu0 0.0
    %772 = vmatprep.subr.mxu0 0.0
    %773 = vmatpush1.msra.mxu0 0.0
    %774 = vmatprep.mubr.f32.mxu0 0.0
    %v775 = vand.u32 %v180, 4294901760
    %v776 = vsub.f32 %v180, %v775
    %777 = vmatmul.mubr.f32.gmra.mrb[0].mxu0 %v776
    %v778 = vpop.f32.mrb[0].mxu0
    %v779 = vadd.f32 %v585, %v778
    %v780 = vpop.f32.mrb[0].mxu0
    %781 = vmatprep.mubr.f32.mxu0 0.0
    %v782 = vand.u32 %v181, 4294901760
    %v783 = vsub.f32 %v181, %v782
    %784 = vmatmul.mubr.f32.gmra.mrb[0].mxu0 %v783
    %v785 = vpop.f32.mrb[0].mxu0
    %v786 = vadd.f32 %v591, %v785
    %v787 = vpop.f32.mrb[0].mxu0
    %788 = vmatprep.mubr.f32.mxu0 0.0
    %v789 = vand.u32 %v182, 4294901760
    %v790 = vsub.f32 %v182, %v789
    %791 = vmatmul.mubr.f32.gmra.mrb[0].mxu0 %v790
    %v792 = vpop.f32.mrb[0].mxu0
    %v793 = vadd.f32 %v597, %v792
    %v794 = vpop.f32.mrb[0].mxu0
    %795 = vmatprep.mubr.f32.mxu0 0.0
    %v796 = vand.u32 %v183, 4294901760
    %v797 = vsub.f32 %v183, %v796
    %798 = vmatmul.mubr.f32.gmra.mrb[0].mxu0 %v797
    %v799 = vpop.f32.mrb[0].mxu0
    %v800 = vadd.f32 %v603, %v799
    %v801 = vpop.f32.mrb[0].mxu0
    %802 = vmatprep.mubr.f32.mxu0 0.0
    %v803 = vand.u32 %v184, 4294901760
    %v804 = vsub.f32 %v184, %v803
    %805 = vmatmul.mubr.f32.gmra.mrb[0].mxu0 %v804
    %v806 = vpop.f32.mrb[0].mxu0
    %v807 = vadd.f32 %v609, %v806
    %v808 = vpop.f32.mrb[0].mxu0
    %809 = vmatprep.mubr.f32.mxu0 0.0
    %v810 = vand.u32 %v185, 4294901760
    %v811 = vsub.f32 %v185, %v810
    %812 = vmatmul.mubr.f32.gmra.mrb[0].mxu0 %v811
    %v813 = vpop.f32.mrb[0].mxu0
    %v814 = vadd.f32 %v615, %v813
    %v815 = vpop.f32.mrb[0].mxu0
    %816 = vmatprep.mubr.f32.mxu0 0.0
    %v817 = vand.u32 %v186, 4294901760
    %v818 = vsub.f32 %v186, %v817
    %819 = vmatmul.mubr.f32.gmra.mrb[0].mxu0 %v818
    %v820 = vpop.f32.mrb[0].mxu0
    %v821 = vadd.f32 %v621, %v820
    %v822 = vpop.f32.mrb[0].mxu0
    %823 = vmatprep.mubr.f32.mxu0 0.0
    %v824 = vand.u32 %v187, 4294901760
    %v825 = vsub.f32 %v187, %v824
    %826 = vmatmul.mubr.f32.gmra.mrb[0].mxu0 %v825
    %v827 = vpop.f32.mrb[0].mxu0
    %v828 = vadd.f32 %v627, %v827
    %v829 = vpop.f32.mrb[0].mxu0
    %830 = vmatprep.mubr.f32.mxu0 0.0
    %v831 = vand.u32 %v188, 4294901760
    %v832 = vsub.f32 %v188, %v831
    %833 = vmatmul.mubr.f32.gmra.mrb[0].mxu0 %v832
    %v834 = vpop.f32.mrb[0].mxu0
    %v835 = vadd.f32 %v633, %v834
    %v836 = vpop.f32.mrb[0].mxu0
    %837 = vmatprep.mubr.f32.mxu0 0.0
    %v838 = vand.u32 %v189, 4294901760
    %v839 = vsub.f32 %v189, %v838
    %840 = vmatmul.mubr.f32.gmra.mrb[0].mxu0 %v839
    %v841 = vpop.f32.mrb[0].mxu0
    %v842 = vadd.f32 %v639, %v841
    %v843 = vpop.f32.mrb[0].mxu0
    %844 = vmatprep.mubr.f32.mxu0 0.0
    %v845 = vand.u32 %v190, 4294901760
    %v846 = vsub.f32 %v190, %v845
    %847 = vmatmul.mubr.f32.gmra.mrb[0].mxu0 %v846
    %v848 = vpop.f32.mrb[0].mxu0
    %v849 = vadd.f32 %v645, %v848
    %v850 = vpop.f32.mrb[0].mxu0
    %851 = vmatprep.mubr.f32.mxu0 0.0
    %v852 = vand.u32 %v191, 4294901760
    %v853 = vsub.f32 %v191, %v852
    %854 = vmatmul.mubr.f32.gmra.mrb[0].mxu0 %v853
    %v855 = vpop.f32.mrb[0].mxu0
    %v856 = vadd.f32 %v651, %v855
    %v857 = vpop.f32.mrb[0].mxu0
    %858 = vmatprep.mubr.f32.mxu0 0.0
    %v859 = vand.u32 %v192, 4294901760
    %v860 = vsub.f32 %v192, %v859
    %861 = vmatmul.mubr.f32.gmra.mrb[0].mxu0 %v860
    %v862 = vpop.f32.mrb[0].mxu0
    %v863 = vadd.f32 %v657, %v862
    %v864 = vpop.f32.mrb[0].mxu0
    %865 = vmatprep.mubr.f32.mxu0 0.0
    %v866 = vand.u32 %v193, 4294901760
    %v867 = vsub.f32 %v193, %v866
    %868 = vmatmul.mubr.f32.gmra.mrb[0].mxu0 %v867
    %v869 = vpop.f32.mrb[0].mxu0
    %v870 = vadd.f32 %v663, %v869
    %v871 = vpop.f32.mrb[0].mxu0
    %872 = vmatprep.mubr.f32.mxu0 0.0
    %v873 = vand.u32 %v194, 4294901760
    %v874 = vsub.f32 %v194, %v873
    %875 = vmatmul.mubr.f32.gmra.mrb[0].mxu0 %v874
    %v876 = vpop.f32.mrb[0].mxu0
    %v877 = vadd.f32 %v669, %v876
    %v878 = vpop.f32.mrb[0].mxu0
    %879 = vmatprep.mubr.f32.mxu0 0.0
    %v880 = vand.u32 %v195, 4294901760
    %v881 = vsub.f32 %v195, %v880
    %882 = vmatmul.mubr.f32.gmra.mrb[0].mxu0 %v881
    %v883 = vpop.f32.mrb[0].mxu0
    %v884 = vadd.f32 %v675, %v883
    %v885 = vpop.f32.mrb[0].mxu0
    %886 = vdwg.mxu0
    %887 = vmatprep.subr.mxu0 0.0
    %v888 = vand.u32 %v112, 4294901760
    %889 = vmatpush1.msra.mxu0 %v888
    %890 = vmatprep.subr.mxu0 0.0
    %v891 = vand.u32 %v113, 4294901760
    %892 = vmatpush1.msra.mxu0 %v891
    %893 = vmatprep.subr.mxu0 0.0
    %v894 = vand.u32 %v114, 4294901760
    %895 = vmatpush1.msra.mxu0 %v894
    %896 = vmatprep.subr.mxu0 0.0
    %v897 = vand.u32 %v115, 4294901760
    %898 = vmatpush1.msra.mxu0 %v897
    %899 = vmatprep.subr.mxu0 0.0
    %v900 = vand.u32 %v116, 4294901760
    %901 = vmatpush1.msra.mxu0 %v900
    %902 = vmatprep.subr.mxu0 0.0
    %v903 = vand.u32 %v117, 4294901760
    %904 = vmatpush1.msra.mxu0 %v903
    %905 = vmatprep.subr.mxu0 0.0
    %v906 = vand.u32 %v118, 4294901760
    %907 = vmatpush1.msra.mxu0 %v906
    %908 = vmatprep.subr.mxu0 0.0
    %v909 = vand.u32 %v119, 4294901760
    %910 = vmatpush1.msra.mxu0 %v909
    %911 = vmatprep.subr.mxu0 0.0
    %v912 = vand.u32 %v120, 4294901760
    %913 = vmatpush1.msra.mxu0 %v912
    %914 = vmatprep.subr.mxu0 0.0
    %v915 = vand.u32 %v121, 4294901760
    %916 = vmatpush1.msra.mxu0 %v915
    %917 = vmatprep.subr.mxu0 0.0
    %v918 = vand.u32 %v122, 4294901760
    %919 = vmatpush1.msra.mxu0 %v918
    %920 = vmatprep.subr.mxu0 0.0
    %v921 = vand.u32 %v123, 4294901760
    %922 = vmatpush1.msra.mxu0 %v921
    %923 = vmatprep.subr.mxu0 0.0
    %v924 = vand.u32 %v124, 4294901760
    %925 = vmatpush1.msra.mxu0 %v924
    %926 = vmatprep.subr.mxu0 0.0
    %v927 = vand.u32 %v125, 4294901760
    %928 = vmatpush1.msra.mxu0 %v927
    %929 = vmatprep.subr.mxu0 0.0
    %v930 = vand.u32 %v126, 4294901760
    %931 = vmatpush1.msra.mxu0 %v930
    %932 = vmatprep.subr.mxu0 0.0
    %v933 = vand.u32 %v127, 4294901760
    %934 = vmatpush1.msra.mxu0 %v933
    %935 = vmatprep.subr.mxu0 0.0
    %936 = vmatpush1.msra.mxu0 0.0
    %937 = vmatprep.subr.mxu0 0.0
    %938 = vmatpush1.msra.mxu0 0.0
    %939 = vmatprep.subr.mxu0 0.0
    %940 = vmatpush1.msra.mxu0 0.0
    %941 = vmatprep.subr.mxu0 0.0
    %942 = vmatpush1.msra.mxu0 0.0
    %943 = vmatprep.subr.mxu0 0.0
    %944 = vmatpush1.msra.mxu0 0.0
    %945 = vmatprep.subr.mxu0 0.0
    %946 = vmatpush1.msra.mxu0 0.0
    %947 = vmatprep.subr.mxu0 0.0
    %948 = vmatpush1.msra.mxu0 0.0
    %949 = vmatprep.subr.mxu0 0.0
    %950 = vmatpush1.msra.mxu0 0.0
    %951 = vmatprep.subr.mxu0 0.0
    %952 = vmatpush1.msra.mxu0 0.0
    %953 = vmatprep.subr.mxu0 0.0
    %954 = vmatpush1.msra.mxu0 0.0
    %955 = vmatprep.subr.mxu0 0.0
    %956 = vmatpush1.msra.mxu0 0.0
    %957 = vmatprep.subr.mxu0 0.0
    %958 = vmatpush1.msra.mxu0 0.0
    %959 = vmatprep.subr.mxu0 0.0
    %960 = vmatpush1.msra.mxu0 0.0
    %961 = vmatprep.subr.mxu0 0.0
    %962 = vmatpush1.msra.mxu0 0.0
    %963 = vmatprep.subr.mxu0 0.0
    %964 = vmatpush1.msra.mxu0 0.0
    %965 = vmatprep.subr.mxu0 0.0
    %966 = vmatpush1.msra.mxu0 0.0
    %967 = vmatprep.mubr.f32.mxu0 0.0
    %v968 = vand.u32 %v180, 4294901760
    %v969 = vsub.f32 %v180, %v968
    %v970 = vand.u32 %v969, 4294901760
    %971 = vmatmul.mubr.f32.gmra.mrb[0].mxu0 %v970
    %v972 = vpop.f32.mrb[0].mxu0
    %v973 = vadd.f32 %v779, %v972
    %v974 = vpop.f32.mrb[0].mxu0
    %975 = vmatprep.mubr.f32.mxu0 0.0
    %v976 = vand.u32 %v181, 4294901760
    %v977 = vsub.f32 %v181, %v976
    %v978 = vand.u32 %v977, 4294901760
    %979 = vmatmul.mubr.f32.gmra.mrb[0].mxu0 %v978
    %v980 = vpop.f32.mrb[0].mxu0
    %v981 = vadd.f32 %v786, %v980
    %v982 = vpop.f32.mrb[0].mxu0
    %983 = vmatprep.mubr.f32.mxu0 0.0
    %v984 = vand.u32 %v182, 4294901760
    %v985 = vsub.f32 %v182, %v984
    %v986 = vand.u32 %v985, 4294901760
    %987 = vmatmul.mubr.f32.gmra.mrb[0].mxu0 %v986
    %v988 = vpop.f32.mrb[0].mxu0
    %v989 = vadd.f32 %v793, %v988
    %v990 = vpop.f32.mrb[0].mxu0
    %991 = vmatprep.mubr.f32.mxu0 0.0
    %v992 = vand.u32 %v183, 4294901760
    %v993 = vsub.f32 %v183, %v992
    %v994 = vand.u32 %v993, 4294901760
    %995 = vmatmul.mubr.f32.gmra.mrb[0].mxu0 %v994
    %v996 = vpop.f32.mrb[0].mxu0
    %v997 = vadd.f32 %v800, %v996
    %v998 = vpop.f32.mrb[0].mxu0
    %999 = vmatprep.mubr.f32.mxu0 0.0
    %v1000 = vand.u32 %v184, 4294901760
    %v1001 = vsub.f32 %v184, %v1000
    %v1002 = vand.u32 %v1001, 4294901760
    %1003 = vmatmul.mubr.f32.gmra.mrb[0].mxu0 %v1002
    %v1004 = vpop.f32.mrb[0].mxu0
    %v1005 = vadd.f32 %v807, %v1004
    %v1006 = vpop.f32.mrb[0].mxu0
    %1007 = vmatprep.mubr.f32.mxu0 0.0
    %v1008 = vand.u32 %v185, 4294901760
    %v1009 = vsub.f32 %v185, %v1008
    %v1010 = vand.u32 %v1009, 4294901760
    %1011 = vmatmul.mubr.f32.gmra.mrb[0].mxu0 %v1010
    %v1012 = vpop.f32.mrb[0].mxu0
    %v1013 = vadd.f32 %v814, %v1012
    %v1014 = vpop.f32.mrb[0].mxu0
    %1015 = vmatprep.mubr.f32.mxu0 0.0
    %v1016 = vand.u32 %v186, 4294901760
    %v1017 = vsub.f32 %v186, %v1016
    %v1018 = vand.u32 %v1017, 4294901760
    %1019 = vmatmul.mubr.f32.gmra.mrb[0].mxu0 %v1018
    %v1020 = vpop.f32.mrb[0].mxu0
    %v1021 = vadd.f32 %v821, %v1020
    %v1022 = vpop.f32.mrb[0].mxu0
    %1023 = vmatprep.mubr.f32.mxu0 0.0
    %v1024 = vand.u32 %v187, 4294901760
    %v1025 = vsub.f32 %v187, %v1024
    %v1026 = vand.u32 %v1025, 4294901760
    %1027 = vmatmul.mubr.f32.gmra.mrb[0].mxu0 %v1026
    %v1028 = vpop.f32.mrb[0].mxu0
    %v1029 = vadd.f32 %v828, %v1028
    %v1030 = vpop.f32.mrb[0].mxu0
    %1031 = vmatprep.mubr.f32.mxu0 0.0
    %v1032 = vand.u32 %v188, 4294901760
    %v1033 = vsub.f32 %v188, %v1032
    %v1034 = vand.u32 %v1033, 4294901760
    %1035 = vmatmul.mubr.f32.gmra.mrb[0].mxu0 %v1034
    %v1036 = vpop.f32.mrb[0].mxu0
    %v1037 = vadd.f32 %v835, %v1036
    %v1038 = vpop.f32.mrb[0].mxu0
    %1039 = vmatprep.mubr.f32.mxu0 0.0
    %v1040 = vand.u32 %v189, 4294901760
    %v1041 = vsub.f32 %v189, %v1040
    %v1042 = vand.u32 %v1041, 4294901760
    %1043 = vmatmul.mubr.f32.gmra.mrb[0].mxu0 %v1042
    %v1044 = vpop.f32.mrb[0].mxu0
    %v1045 = vadd.f32 %v842, %v1044
    %v1046 = vpop.f32.mrb[0].mxu0
    %1047 = vmatprep.mubr.f32.mxu0 0.0
    %v1048 = vand.u32 %v190, 4294901760
    %v1049 = vsub.f32 %v190, %v1048
    %v1050 = vand.u32 %v1049, 4294901760
    %1051 = vmatmul.mubr.f32.gmra.mrb[0].mxu0 %v1050
    %v1052 = vpop.f32.mrb[0].mxu0
    %v1053 = vadd.f32 %v849, %v1052
    %v1054 = vpop.f32.mrb[0].mxu0
    %1055 = vmatprep.mubr.f32.mxu0 0.0
    %v1056 = vand.u32 %v191, 4294901760
    %v1057 = vsub.f32 %v191, %v1056
    %v1058 = vand.u32 %v1057, 4294901760
    %1059 = vmatmul.mubr.f32.gmra.mrb[0].mxu0 %v1058
    %v1060 = vpop.f32.mrb[0].mxu0
    %v1061 = vadd.f32 %v856, %v1060
    %v1062 = vpop.f32.mrb[0].mxu0
    %1063 = vmatprep.mubr.f32.mxu0 0.0
    %v1064 = vand.u32 %v192, 4294901760
    %v1065 = vsub.f32 %v192, %v1064
    %v1066 = vand.u32 %v1065, 4294901760
    %1067 = vmatmul.mubr.f32.gmra.mrb[0].mxu0 %v1066
    %v1068 = vpop.f32.mrb[0].mxu0
    %v1069 = vadd.f32 %v863, %v1068
    %v1070 = vpop.f32.mrb[0].mxu0
    %1071 = vmatprep.mubr.f32.mxu0 0.0
    %v1072 = vand.u32 %v193, 4294901760
    %v1073 = vsub.f32 %v193, %v1072
    %v1074 = vand.u32 %v1073, 4294901760
    %1075 = vmatmul.mubr.f32.gmra.mrb[0].mxu0 %v1074
    %v1076 = vpop.f32.mrb[0].mxu0
    %v1077 = vadd.f32 %v870, %v1076
    %v1078 = vpop.f32.mrb[0].mxu0
    %1079 = vmatprep.mubr.f32.mxu0 0.0
    %v1080 = vand.u32 %v194, 4294901760
    %v1081 = vsub.f32 %v194, %v1080
    %v1082 = vand.u32 %v1081, 4294901760
    %1083 = vmatmul.mubr.f32.gmra.mrb[0].mxu0 %v1082
    %v1084 = vpop.f32.mrb[0].mxu0
    %v1085 = vadd.f32 %v877, %v1084
    %v1086 = vpop.f32.mrb[0].mxu0
    %1087 = vmatprep.mubr.f32.mxu0 0.0
    %v1088 = vand.u32 %v195, 4294901760
    %v1089 = vsub.f32 %v195, %v1088
    %v1090 = vand.u32 %v1089, 4294901760
    %1091 = vmatmul.mubr.f32.gmra.mrb[0].mxu0 %v1090
    %v1092 = vpop.f32.mrb[0].mxu0
    %v1093 = vadd.f32 %v884, %v1092
    %v1094 = vpop.f32.mrb[0].mxu0
    %1095 = vdwg.mxu0
    %1096 = vmatprep.subr.mxu0 0.0
    %v1097 = vand.u32 %v112, 4294901760
    %v1098 = vsub.f32 %v112, %v1097
    %v1099 = vand.u32 %v1098, 4294901760
    %1100 = vmatpush1.msra.mxu0 %v1099
    %1101 = vmatprep.subr.mxu0 0.0
    %v1102 = vand.u32 %v113, 4294901760
    %v1103 = vsub.f32 %v113, %v1102
    %v1104 = vand.u32 %v1103, 4294901760
    %1105 = vmatpush1.msra.mxu0 %v1104
    %1106 = vmatprep.subr.mxu0 0.0
    %v1107 = vand.u32 %v114, 4294901760
    %v1108 = vsub.f32 %v114, %v1107
    %v1109 = vand.u32 %v1108, 4294901760
    %1110 = vmatpush1.msra.mxu0 %v1109
    %1111 = vmatprep.subr.mxu0 0.0
    %v1112 = vand.u32 %v115, 4294901760
    %v1113 = vsub.f32 %v115, %v1112
    %v1114 = vand.u32 %v1113, 4294901760
    %1115 = vmatpush1.msra.mxu0 %v1114
    %1116 = vmatprep.subr.mxu0 0.0
    %v1117 = vand.u32 %v116, 4294901760
    %v1118 = vsub.f32 %v116, %v1117
    %v1119 = vand.u32 %v1118, 4294901760
    %1120 = vmatpush1.msra.mxu0 %v1119
    %1121 = vmatprep.subr.mxu0 0.0
    %v1122 = vand.u32 %v117, 4294901760
    %v1123 = vsub.f32 %v117, %v1122
    %v1124 = vand.u32 %v1123, 4294901760
    %1125 = vmatpush1.msra.mxu0 %v1124
    %1126 = vmatprep.subr.mxu0 0.0
    %v1127 = vand.u32 %v118, 4294901760
    %v1128 = vsub.f32 %v118, %v1127
    %v1129 = vand.u32 %v1128, 4294901760
    %1130 = vmatpush1.msra.mxu0 %v1129
    %1131 = vmatprep.subr.mxu0 0.0
    %v1132 = vand.u32 %v119, 4294901760
    %v1133 = vsub.f32 %v119, %v1132
    %v1134 = vand.u32 %v1133, 4294901760
    %1135 = vmatpush1.msra.mxu0 %v1134
    %1136 = vmatprep.subr.mxu0 0.0
    %v1137 = vand.u32 %v120, 4294901760
    %v1138 = vsub.f32 %v120, %v1137
    %v1139 = vand.u32 %v1138, 4294901760
    %1140 = vmatpush1.msra.mxu0 %v1139
    %1141 = vmatprep.subr.mxu0 0.0
    %v1142 = vand.u32 %v121, 4294901760
    %v1143 = vsub.f32 %v121, %v1142
    %v1144 = vand.u32 %v1143, 4294901760
    %1145 = vmatpush1.msra.mxu0 %v1144
    %1146 = vmatprep.subr.mxu0 0.0
    %v1147 = vand.u32 %v122, 4294901760
    %v1148 = vsub.f32 %v122, %v1147
    %v1149 = vand.u32 %v1148, 4294901760
    %1150 = vmatpush1.msra.mxu0 %v1149
    %1151 = vmatprep.subr.mxu0 0.0
    %v1152 = vand.u32 %v123, 4294901760
    %v1153 = vsub.f32 %v123, %v1152
    %v1154 = vand.u32 %v1153, 4294901760
    %1155 = vmatpush1.msra.mxu0 %v1154
    %1156 = vmatprep.subr.mxu0 0.0
    %v1157 = vand.u32 %v124, 4294901760
    %v1158 = vsub.f32 %v124, %v1157
    %v1159 = vand.u32 %v1158, 4294901760
    %1160 = vmatpush1.msra.mxu0 %v1159
    %1161 = vmatprep.subr.mxu0 0.0
    %v1162 = vand.u32 %v125, 4294901760
    %v1163 = vsub.f32 %v125, %v1162
    %v1164 = vand.u32 %v1163, 4294901760
    %1165 = vmatpush1.msra.mxu0 %v1164
    %1166 = vmatprep.subr.mxu0 0.0
    %v1167 = vand.u32 %v126, 4294901760
    %v1168 = vsub.f32 %v126, %v1167
    %v1169 = vand.u32 %v1168, 4294901760
    %1170 = vmatpush1.msra.mxu0 %v1169
    %1171 = vmatprep.subr.mxu0 0.0
    %v1172 = vand.u32 %v127, 4294901760
    %v1173 = vsub.f32 %v127, %v1172
    %v1174 = vand.u32 %v1173, 4294901760
    %1175 = vmatpush1.msra.mxu0 %v1174
    %1176 = vmatprep.subr.mxu0 0.0
    %1177 = vmatpush1.msra.mxu0 0.0
    %1178 = vmatprep.subr.mxu0 0.0
    %1179 = vmatpush1.msra.mxu0 0.0
    %1180 = vmatprep.subr.mxu0 0.0
    %1181 = vmatpush1.msra.mxu0 0.0
    %1182 = vmatprep.subr.mxu0 0.0
    %1183 = vmatpush1.msra.mxu0 0.0
    %1184 = vmatprep.subr.mxu0 0.0
    %1185 = vmatpush1.msra.mxu0 0.0
    %1186 = vmatprep.subr.mxu0 0.0
    %1187 = vmatpush1.msra.mxu0 0.0
    %1188 = vmatprep.subr.mxu0 0.0
    %1189 = vmatpush1.msra.mxu0 0.0
    %1190 = vmatprep.subr.mxu0 0.0
    %1191 = vmatpush1.msra.mxu0 0.0
    %1192 = vmatprep.subr.mxu0 0.0
    %1193 = vmatpush1.msra.mxu0 0.0
    %1194 = vmatprep.subr.mxu0 0.0
    %1195 = vmatpush1.msra.mxu0 0.0
    %1196 = vmatprep.subr.mxu0 0.0
    %1197 = vmatpush1.msra.mxu0 0.0
    %1198 = vmatprep.subr.mxu0 0.0
    %1199 = vmatpush1.msra.mxu0 0.0
    %1200 = vmatprep.subr.mxu0 0.0
    %1201 = vmatpush1.msra.mxu0 0.0
    %1202 = vmatprep.subr.mxu0 0.0
    %1203 = vmatpush1.msra.mxu0 0.0
    %1204 = vmatprep.subr.mxu0 0.0
    %1205 = vmatpush1.msra.mxu0 0.0
    %1206 = vmatprep.subr.mxu0 0.0
    %1207 = vmatpush1.msra.mxu0 0.0
    %1208 = vmatprep.mubr.f32.mxu0 0.0
    %v1209 = vand.u32 %v180, 4294901760
    %1210 = vmatmul.mubr.f32.gmra.mrb[0].mxu0 %v1209
    %v1211 = vpop.f32.mrb[0].mxu0
    %v1212 = vadd.f32 %v973, %v1211
    %v1213 = vpop.f32.mrb[0].mxu0
    %1214 = vmatprep.mubr.f32.mxu0 0.0
    %v1215 = vand.u32 %v181, 4294901760
    %1216 = vmatmul.mubr.f32.gmra.mrb[0].mxu0 %v1215
    %v1217 = vpop.f32.mrb[0].mxu0
    %v1218 = vadd.f32 %v981, %v1217
    %v1219 = vpop.f32.mrb[0].mxu0
    %1220 = vmatprep.mubr.f32.mxu0 0.0
    %v1221 = vand.u32 %v182, 4294901760
    %1222 = vmatmul.mubr.f32.gmra.mrb[0].mxu0 %v1221
    %v1223 = vpop.f32.mrb[0].mxu0
    %v1224 = vadd.f32 %v989, %v1223
    %v1225 = vpop.f32.mrb[0].mxu0
    %1226 = vmatprep.mubr.f32.mxu0 0.0
    %v1227 = vand.u32 %v183, 4294901760
    %1228 = vmatmul.mubr.f32.gmra.mrb[0].mxu0 %v1227
    %v1229 = vpop.f32.mrb[0].mxu0
    %v1230 = vadd.f32 %v997, %v1229
    %v1231 = vpop.f32.mrb[0].mxu0
    %1232 = vmatprep.mubr.f32.mxu0 0.0
    %v1233 = vand.u32 %v184, 4294901760
    %1234 = vmatmul.mubr.f32.gmra.mrb[0].mxu0 %v1233
    %v1235 = vpop.f32.mrb[0].mxu0
    %v1236 = vadd.f32 %v1005, %v1235
    %v1237 = vpop.f32.mrb[0].mxu0
    %1238 = vmatprep.mubr.f32.mxu0 0.0
    %v1239 = vand.u32 %v185, 4294901760
    %1240 = vmatmul.mubr.f32.gmra.mrb[0].mxu0 %v1239
    %v1241 = vpop.f32.mrb[0].mxu0
    %v1242 = vadd.f32 %v1013, %v1241
    %v1243 = vpop.f32.mrb[0].mxu0
    %1244 = vmatprep.mubr.f32.mxu0 0.0
    %v1245 = vand.u32 %v186, 4294901760
    %1246 = vmatmul.mubr.f32.gmra.mrb[0].mxu0 %v1245
    %v1247 = vpop.f32.mrb[0].mxu0
    %v1248 = vadd.f32 %v1021, %v1247
    %v1249 = vpop.f32.mrb[0].mxu0
    %1250 = vmatprep.mubr.f32.mxu0 0.0
    %v1251 = vand.u32 %v187, 4294901760
    %1252 = vmatmul.mubr.f32.gmra.mrb[0].mxu0 %v1251
    %v1253 = vpop.f32.mrb[0].mxu0
    %v1254 = vadd.f32 %v1029, %v1253
    %v1255 = vpop.f32.mrb[0].mxu0
    %1256 = vmatprep.mubr.f32.mxu0 0.0
    %v1257 = vand.u32 %v188, 4294901760
    %1258 = vmatmul.mubr.f32.gmra.mrb[0].mxu0 %v1257
    %v1259 = vpop.f32.mrb[0].mxu0
    %v1260 = vadd.f32 %v1037, %v1259
    %v1261 = vpop.f32.mrb[0].mxu0
    %1262 = vmatprep.mubr.f32.mxu0 0.0
    %v1263 = vand.u32 %v189, 4294901760
    %1264 = vmatmul.mubr.f32.gmra.mrb[0].mxu0 %v1263
    %v1265 = vpop.f32.mrb[0].mxu0
    %v1266 = vadd.f32 %v1045, %v1265
    %v1267 = vpop.f32.mrb[0].mxu0
    %1268 = vmatprep.mubr.f32.mxu0 0.0
    %v1269 = vand.u32 %v190, 4294901760
    %1270 = vmatmul.mubr.f32.gmra.mrb[0].mxu0 %v1269
    %v1271 = vpop.f32.mrb[0].mxu0
    %v1272 = vadd.f32 %v1053, %v1271
    %v1273 = vpop.f32.mrb[0].mxu0
    %1274 = vmatprep.mubr.f32.mxu0 0.0
    %v1275 = vand.u32 %v191, 4294901760
    %1276 = vmatmul.mubr.f32.gmra.mrb[0].mxu0 %v1275
    %v1277 = vpop.f32.mrb[0].mxu0
    %v1278 = vadd.f32 %v1061, %v1277
    %v1279 = vpop.f32.mrb[0].mxu0
    %1280 = vmatprep.mubr.f32.mxu0 0.0
    %v1281 = vand.u32 %v192, 4294901760
    %1282 = vmatmul.mubr.f32.gmra.mrb[0].mxu0 %v1281
    %v1283 = vpop.f32.mrb[0].mxu0
    %v1284 = vadd.f32 %v1069, %v1283
    %v1285 = vpop.f32.mrb[0].mxu0
    %1286 = vmatprep.mubr.f32.mxu0 0.0
    %v1287 = vand.u32 %v193, 4294901760
    %1288 = vmatmul.mubr.f32.gmra.mrb[0].mxu0 %v1287
    %v1289 = vpop.f32.mrb[0].mxu0
    %v1290 = vadd.f32 %v1077, %v1289
    %v1291 = vpop.f32.mrb[0].mxu0
    %1292 = vmatprep.mubr.f32.mxu0 0.0
    %v1293 = vand.u32 %v194, 4294901760
    %1294 = vmatmul.mubr.f32.gmra.mrb[0].mxu0 %v1293
    %v1295 = vpop.f32.mrb[0].mxu0
    %v1296 = vadd.f32 %v1085, %v1295
    %v1297 = vpop.f32.mrb[0].mxu0
    %1298 = vmatprep.mubr.f32.mxu0 0.0
    %v1299 = vand.u32 %v195, 4294901760
    %1300 = vmatmul.mubr.f32.gmra.mrb[0].mxu0 %v1299
    %v1301 = vpop.f32.mrb[0].mxu0
    %v1302 = vadd.f32 %v1093, %v1301
    %v1303 = vpop.f32.mrb[0].mxu0
    %1304 = vdwg.mxu0
    %1305 = vmatprep.subr.mxu0 0.0
    %v1306 = vand.u32 %v112, 4294901760
    %1307 = vmatpush1.msra.mxu0 %v1306
    %1308 = vmatprep.subr.mxu0 0.0
    %v1309 = vand.u32 %v113, 4294901760
    %1310 = vmatpush1.msra.mxu0 %v1309
    %1311 = vmatprep.subr.mxu0 0.0
    %v1312 = vand.u32 %v114, 4294901760
    %1313 = vmatpush1.msra.mxu0 %v1312
    %1314 = vmatprep.subr.mxu0 0.0
    %v1315 = vand.u32 %v115, 4294901760
    %1316 = vmatpush1.msra.mxu0 %v1315
    %1317 = vmatprep.subr.mxu0 0.0
    %v1318 = vand.u32 %v116, 4294901760
    %1319 = vmatpush1.msra.mxu0 %v1318
    %1320 = vmatprep.subr.mxu0 0.0
    %v1321 = vand.u32 %v117, 4294901760
    %1322 = vmatpush1.msra.mxu0 %v1321
    %1323 = vmatprep.subr.mxu0 0.0
    %v1324 = vand.u32 %v118, 4294901760
    %1325 = vmatpush1.msra.mxu0 %v1324
    %1326 = vmatprep.subr.mxu0 0.0
    %v1327 = vand.u32 %v119, 4294901760
    %1328 = vmatpush1.msra.mxu0 %v1327
    %1329 = vmatprep.subr.mxu0 0.0
    %v1330 = vand.u32 %v120, 4294901760
    %1331 = vmatpush1.msra.mxu0 %v1330
    %1332 = vmatprep.subr.mxu0 0.0
    %v1333 = vand.u32 %v121, 4294901760
    %1334 = vmatpush1.msra.mxu0 %v1333
    %1335 = vmatprep.subr.mxu0 0.0
    %v1336 = vand.u32 %v122, 4294901760
    %1337 = vmatpush1.msra.mxu0 %v1336
    %1338 = vmatprep.subr.mxu0 0.0
    %v1339 = vand.u32 %v123, 4294901760
    %1340 = vmatpush1.msra.mxu0 %v1339
    %1341 = vmatprep.subr.mxu0 0.0
    %v1342 = vand.u32 %v124, 4294901760
    %1343 = vmatpush1.msra.mxu0 %v1342
    %1344 = vmatprep.subr.mxu0 0.0
    %v1345 = vand.u32 %v125, 4294901760
    %1346 = vmatpush1.msra.mxu0 %v1345
    %1347 = vmatprep.subr.mxu0 0.0
    %v1348 = vand.u32 %v126, 4294901760
    %1349 = vmatpush1.msra.mxu0 %v1348
    %1350 = vmatprep.subr.mxu0 0.0
    %v1351 = vand.u32 %v127, 4294901760
    %1352 = vmatpush1.msra.mxu0 %v1351
    %1353 = vmatprep.subr.mxu0 0.0
    %1354 = vmatpush1.msra.mxu0 0.0
    %1355 = vmatprep.subr.mxu0 0.0
    %1356 = vmatpush1.msra.mxu0 0.0
    %1357 = vmatprep.subr.mxu0 0.0
    %1358 = vmatpush1.msra.mxu0 0.0
    %1359 = vmatprep.subr.mxu0 0.0
    %1360 = vmatpush1.msra.mxu0 0.0
    %1361 = vmatprep.subr.mxu0 0.0
    %1362 = vmatpush1.msra.mxu0 0.0
    %1363 = vmatprep.subr.mxu0 0.0
    %1364 = vmatpush1.msra.mxu0 0.0
    %1365 = vmatprep.subr.mxu0 0.0
    %1366 = vmatpush1.msra.mxu0 0.0
    %1367 = vmatprep.subr.mxu0 0.0
    %1368 = vmatpush1.msra.mxu0 0.0
    %1369 = vmatprep.subr.mxu0 0.0
    %1370 = vmatpush1.msra.mxu0 0.0
    %1371 = vmatprep.subr.mxu0 0.0
    %1372 = vmatpush1.msra.mxu0 0.0
    %1373 = vmatprep.subr.mxu0 0.0
    %1374 = vmatpush1.msra.mxu0 0.0
    %1375 = vmatprep.subr.mxu0 0.0
    %1376 = vmatpush1.msra.mxu0 0.0
    %1377 = vmatprep.subr.mxu0 0.0
    %1378 = vmatpush1.msra.mxu0 0.0
    %1379 = vmatprep.subr.mxu0 0.0
    %1380 = vmatpush1.msra.mxu0 0.0
    %1381 = vmatprep.subr.mxu0 0.0
    %1382 = vmatpush1.msra.mxu0 0.0
    %1383 = vmatprep.subr.mxu0 0.0
    %1384 = vmatpush1.msra.mxu0 0.0
    %1385 = vmatprep.mubr.f32.mxu0 0.0
    %v1386 = vand.u32 %v180, 4294901760
    %1387 = vmatmul.mubr.f32.gmra.mrb[0].mxu0 %v1386
    %v1388 = vpop.f32.mrb[0].mxu0
    %v1389 = vadd.f32 %v1212, %v1388
    %v1390 = vpop.f32.mrb[0].mxu0
    %1391 = vmatprep.mubr.f32.mxu0 0.0
    %v1392 = vand.u32 %v181, 4294901760
    %1393 = vmatmul.mubr.f32.gmra.mrb[0].mxu0 %v1392
    %v1394 = vpop.f32.mrb[0].mxu0
    %v1395 = vadd.f32 %v1218, %v1394
    %v1396 = vpop.f32.mrb[0].mxu0
    %1397 = vmatprep.mubr.f32.mxu0 0.0
    %v1398 = vand.u32 %v182, 4294901760
    %1399 = vmatmul.mubr.f32.gmra.mrb[0].mxu0 %v1398
    %v1400 = vpop.f32.mrb[0].mxu0
    %v1401 = vadd.f32 %v1224, %v1400
    %v1402 = vpop.f32.mrb[0].mxu0
    %1403 = vmatprep.mubr.f32.mxu0 0.0
    %v1404 = vand.u32 %v183, 4294901760
    %1405 = vmatmul.mubr.f32.gmra.mrb[0].mxu0 %v1404
    %v1406 = vpop.f32.mrb[0].mxu0
    %v1407 = vadd.f32 %v1230, %v1406
    %v1408 = vpop.f32.mrb[0].mxu0
    %1409 = vmatprep.mubr.f32.mxu0 0.0
    %v1410 = vand.u32 %v184, 4294901760
    %1411 = vmatmul.mubr.f32.gmra.mrb[0].mxu0 %v1410
    %v1412 = vpop.f32.mrb[0].mxu0
    %v1413 = vadd.f32 %v1236, %v1412
    %v1414 = vpop.f32.mrb[0].mxu0
    %1415 = vmatprep.mubr.f32.mxu0 0.0
    %v1416 = vand.u32 %v185, 4294901760
    %1417 = vmatmul.mubr.f32.gmra.mrb[0].mxu0 %v1416
    %v1418 = vpop.f32.mrb[0].mxu0
    %v1419 = vadd.f32 %v1242, %v1418
    %v1420 = vpop.f32.mrb[0].mxu0
    %1421 = vmatprep.mubr.f32.mxu0 0.0
    %v1422 = vand.u32 %v186, 4294901760
    %1423 = vmatmul.mubr.f32.gmra.mrb[0].mxu0 %v1422
    %v1424 = vpop.f32.mrb[0].mxu0
    %v1425 = vadd.f32 %v1248, %v1424
    %v1426 = vpop.f32.mrb[0].mxu0
    %1427 = vmatprep.mubr.f32.mxu0 0.0
    %v1428 = vand.u32 %v187, 4294901760
    %1429 = vmatmul.mubr.f32.gmra.mrb[0].mxu0 %v1428
    %v1430 = vpop.f32.mrb[0].mxu0
    %v1431 = vadd.f32 %v1254, %v1430
    %v1432 = vpop.f32.mrb[0].mxu0
    %1433 = vmatprep.mubr.f32.mxu0 0.0
    %v1434 = vand.u32 %v188, 4294901760
    %1435 = vmatmul.mubr.f32.gmra.mrb[0].mxu0 %v1434
    %v1436 = vpop.f32.mrb[0].mxu0
    %v1437 = vadd.f32 %v1260, %v1436
    %v1438 = vpop.f32.mrb[0].mxu0
    %1439 = vmatprep.mubr.f32.mxu0 0.0
    %v1440 = vand.u32 %v189, 4294901760
    %1441 = vmatmul.mubr.f32.gmra.mrb[0].mxu0 %v1440
    %v1442 = vpop.f32.mrb[0].mxu0
    %v1443 = vadd.f32 %v1266, %v1442
    %v1444 = vpop.f32.mrb[0].mxu0
    %1445 = vmatprep.mubr.f32.mxu0 0.0
    %v1446 = vand.u32 %v190, 4294901760
    %1447 = vmatmul.mubr.f32.gmra.mrb[0].mxu0 %v1446
    %v1448 = vpop.f32.mrb[0].mxu0
    %v1449 = vadd.f32 %v1272, %v1448
    %v1450 = vpop.f32.mrb[0].mxu0
    %1451 = vmatprep.mubr.f32.mxu0 0.0
    %v1452 = vand.u32 %v191, 4294901760
    %1453 = vmatmul.mubr.f32.gmra.mrb[0].mxu0 %v1452
    %v1454 = vpop.f32.mrb[0].mxu0
    %v1455 = vadd.f32 %v1278, %v1454
    %v1456 = vpop.f32.mrb[0].mxu0
    %1457 = vmatprep.mubr.f32.mxu0 0.0
    %v1458 = vand.u32 %v192, 4294901760
    %1459 = vmatmul.mubr.f32.gmra.mrb[0].mxu0 %v1458
    %v1460 = vpop.f32.mrb[0].mxu0
    %v1461 = vadd.f32 %v1284, %v1460
    %v1462 = vpop.f32.mrb[0].mxu0
    %1463 = vmatprep.mubr.f32.mxu0 0.0
    %v1464 = vand.u32 %v193, 4294901760
    %1465 = vmatmul.mubr.f32.gmra.mrb[0].mxu0 %v1464
    %v1466 = vpop.f32.mrb[0].mxu0
    %v1467 = vadd.f32 %v1290, %v1466
    %v1468 = vpop.f32.mrb[0].mxu0
    %1469 = vmatprep.mubr.f32.mxu0 0.0
    %v1470 = vand.u32 %v194, 4294901760
    %1471 = vmatmul.mubr.f32.gmra.mrb[0].mxu0 %v1470
    %v1472 = vpop.f32.mrb[0].mxu0
    %v1473 = vadd.f32 %v1296, %v1472
    %v1474 = vpop.f32.mrb[0].mxu0
    %1475 = vmatprep.mubr.f32.mxu0 0.0
    %v1476 = vand.u32 %v195, 4294901760
    %1477 = vmatmul.mubr.f32.gmra.mrb[0].mxu0 %v1476
    %v1478 = vpop.f32.mrb[0].mxu0
    %v1479 = vadd.f32 %v1302, %v1478
    %v1480 = vpop.f32.mrb[0].mxu0
    %1481 = vdwg.mxu0
    %v1482 = vld [vmem:[#allocation7] sm:$0xff]
    %v1483 = vld [vmem:[#allocation7 + $0x8] sm:$0xff]
    %v1484 = vld [vmem:[#allocation7 + $0x10] sm:$0xff]
    %v1485 = vld [vmem:[#allocation7 + $0x18] sm:$0xff]
    %v1486 = vld [vmem:[#allocation7 + $0x20] sm:$0xff]
    %v1487 = vld [vmem:[#allocation7 + $0x28] sm:$0xff]
    %v1488 = vld [vmem:[#allocation7 + $0x30] sm:$0xff]
    %v1489 = vld [vmem:[#allocation7 + $0x38] sm:$0xff]
    %v1490 = vld [vmem:[#allocation7 + $0x40] sm:$0xff]
    %v1491 = vld [vmem:[#allocation7 + $0x48] sm:$0xff]
    %v1492 = vld [vmem:[#allocation7 + $0x50] sm:$0xff]
    %v1493 = vld [vmem:[#allocation7 + $0x58] sm:$0xff]
    %v1494 = vld [vmem:[#allocation7 + $0x60] sm:$0xff]
    %v1495 = vld [vmem:[#allocation7 + $0x68] sm:$0xff]
    %v1496 = vld [vmem:[#allocation7 + $0x70] sm:$0xff]
    %v1497 = vld [vmem:[#allocation7 + $0x78] sm:$0xff]
    %1498 = vmatprep.subr.mxu0 0.0
    %v1499 = vand.u32 %v164, 4294901760
    %1500 = vmatpush1.msra.mxu0 %v1499
    %1501 = vmatprep.subr.mxu0 0.0
    %v1502 = vand.u32 %v165, 4294901760
    %1503 = vmatpush1.msra.mxu0 %v1502
    %1504 = vmatprep.subr.mxu0 0.0
    %v1505 = vand.u32 %v166, 4294901760
    %1506 = vmatpush1.msra.mxu0 %v1505
    %1507 = vmatprep.subr.mxu0 0.0
    %v1508 = vand.u32 %v167, 4294901760
    %1509 = vmatpush1.msra.mxu0 %v1508
    %1510 = vmatprep.subr.mxu0 0.0
    %v1511 = vand.u32 %v168, 4294901760
    %1512 = vmatpush1.msra.mxu0 %v1511
    %1513 = vmatprep.subr.mxu0 0.0
    %v1514 = vand.u32 %v169, 4294901760
    %1515 = vmatpush1.msra.mxu0 %v1514
    %1516 = vmatprep.subr.mxu0 0.0
    %v1517 = vand.u32 %v170, 4294901760
    %1518 = vmatpush1.msra.mxu0 %v1517
    %1519 = vmatprep.subr.mxu0 0.0
    %v1520 = vand.u32 %v171, 4294901760
    %1521 = vmatpush1.msra.mxu0 %v1520
    %1522 = vmatprep.subr.mxu0 0.0
    %v1523 = vand.u32 %v172, 4294901760
    %1524 = vmatpush1.msra.mxu0 %v1523
    %1525 = vmatprep.subr.mxu0 0.0
    %v1526 = vand.u32 %v173, 4294901760
    %1527 = vmatpush1.msra.mxu0 %v1526
    %1528 = vmatprep.subr.mxu0 0.0
    %v1529 = vand.u32 %v174, 4294901760
    %1530 = vmatpush1.msra.mxu0 %v1529
    %1531 = vmatprep.subr.mxu0 0.0
    %v1532 = vand.u32 %v175, 4294901760
    %1533 = vmatpush1.msra.mxu0 %v1532
    %1534 = vmatprep.subr.mxu0 0.0
    %v1535 = vand.u32 %v176, 4294901760
    %1536 = vmatpush1.msra.mxu0 %v1535
    %1537 = vmatprep.subr.mxu0 0.0
    %v1538 = vand.u32 %v177, 4294901760
    %1539 = vmatpush1.msra.mxu0 %v1538
    %1540 = vmatprep.subr.mxu0 0.0
    %v1541 = vand.u32 %v178, 4294901760
    %1542 = vmatpush1.msra.mxu0 %v1541
    %1543 = vmatprep.subr.mxu0 0.0
    %v1544 = vand.u32 %v179, 4294901760
    %1545 = vmatpush1.msra.mxu0 %v1544
    %1546 = vmatprep.subr.mxu0 0.0
    %1547 = vmatpush1.msra.mxu0 0.0
    %1548 = vmatprep.subr.mxu0 0.0
    %1549 = vmatpush1.msra.mxu0 0.0
    %1550 = vmatprep.subr.mxu0 0.0
    %1551 = vmatpush1.msra.mxu0 0.0
    %1552 = vmatprep.subr.mxu0 0.0
    %1553 = vmatpush1.msra.mxu0 0.0
    %1554 = vmatprep.subr.mxu0 0.0
    %1555 = vmatpush1.msra.mxu0 0.0
    %1556 = vmatprep.subr.mxu0 0.0
    %1557 = vmatpush1.msra.mxu0 0.0
    %1558 = vmatprep.subr.mxu0 0.0
    %1559 = vmatpush1.msra.mxu0 0.0
    %1560 = vmatprep.subr.mxu0 0.0
    %1561 = vmatpush1.msra.mxu0 0.0
    %1562 = vmatprep.subr.mxu0 0.0
    %1563 = vmatpush1.msra.mxu0 0.0
    %1564 = vmatprep.subr.mxu0 0.0
    %1565 = vmatpush1.msra.mxu0 0.0
    %1566 = vmatprep.subr.mxu0 0.0
    %1567 = vmatpush1.msra.mxu0 0.0
    %1568 = vmatprep.subr.mxu0 0.0
    %1569 = vmatpush1.msra.mxu0 0.0
    %1570 = vmatprep.subr.mxu0 0.0
    %1571 = vmatpush1.msra.mxu0 0.0
    %1572 = vmatprep.subr.mxu0 0.0
    %1573 = vmatpush1.msra.mxu0 0.0
    %1574 = vmatprep.subr.mxu0 0.0
    %1575 = vmatpush1.msra.mxu0 0.0
    %1576 = vmatprep.subr.mxu0 0.0
    %1577 = vmatpush1.msra.mxu0 0.0
    %1578 = vmatprep.mubr.f32.mxu0 0.0
    %v1579 = vand.u32 %v1482, 4294901760
    %v1580 = vsub.f32 %v1482, %v1579
    %v1581 = vand.u32 %v1580, 4294901760
    %v1582 = vsub.f32 %v1580, %v1581
    %v1583 = vand.u32 %v1582, 4294901760
    %1584 = vmatmul.mubr.f32.gmra.mrb[0].mxu0 %v1583
    %v1585 = vpop.f32.mrb[0].mxu0
    %v1586 = vadd.f32 0.0, %v1585
    %v1587 = vpop.f32.mrb[0].mxu0
    %1588 = vmatprep.mubr.f32.mxu0 0.0
    %v1589 = vand.u32 %v1483, 4294901760
    %v1590 = vsub.f32 %v1483, %v1589
    %v1591 = vand.u32 %v1590, 4294901760
    %v1592 = vsub.f32 %v1590, %v1591
    %v1593 = vand.u32 %v1592, 4294901760
    %1594 = vmatmul.mubr.f32.gmra.mrb[0].mxu0 %v1593
    %v1595 = vpop.f32.mrb[0].mxu0
    %v1596 = vadd.f32 0.0, %v1595
    %v1597 = vpop.f32.mrb[0].mxu0
    %1598 = vmatprep.mubr.f32.mxu0 0.0
    %v1599 = vand.u32 %v1484, 4294901760
    %v1600 = vsub.f32 %v1484, %v1599
    %v1601 = vand.u32 %v1600, 4294901760
    %v1602 = vsub.f32 %v1600, %v1601
    %v1603 = vand.u32 %v1602, 4294901760
    %1604 = vmatmul.mubr.f32.gmra.mrb[0].mxu0 %v1603
    %v1605 = vpop.f32.mrb[0].mxu0
    %v1606 = vadd.f32 0.0, %v1605
    %v1607 = vpop.f32.mrb[0].mxu0
    %1608 = vmatprep.mubr.f32.mxu0 0.0
    %v1609 = vand.u32 %v1485, 4294901760
    %v1610 = vsub.f32 %v1485, %v1609
    %v1611 = vand.u32 %v1610, 4294901760
    %v1612 = vsub.f32 %v1610, %v1611
    %v1613 = vand.u32 %v1612, 4294901760
    %1614 = vmatmul.mubr.f32.gmra.mrb[0].mxu0 %v1613
    %v1615 = vpop.f32.mrb[0].mxu0
    %v1616 = vadd.f32 0.0, %v1615
    %v1617 = vpop.f32.mrb[0].mxu0
    %1618 = vmatprep.mubr.f32.mxu0 0.0
    %v1619 = vand.u32 %v1486, 4294901760
    %v1620 = vsub.f32 %v1486, %v1619
    %v1621 = vand.u32 %v1620, 4294901760
    %v1622 = vsub.f32 %v1620, %v1621
    %v1623 = vand.u32 %v1622, 4294901760
    %1624 = vmatmul.mubr.f32.gmra.mrb[0].mxu0 %v1623
    %v1625 = vpop.f32.mrb[0].mxu0
    %v1626 = vadd.f32 0.0, %v1625
    %v1627 = vpop.f32.mrb[0].mxu0
    %1628 = vmatprep.mubr.f32.mxu0 0.0
    %v1629 = vand.u32 %v1487, 4294901760
    %v1630 = vsub.f32 %v1487, %v1629
    %v1631 = vand.u32 %v1630, 4294901760
    %v1632 = vsub.f32 %v1630, %v1631
    %v1633 = vand.u32 %v1632, 4294901760
    %1634 = vmatmul.mubr.f32.gmra.mrb[0].mxu0 %v1633
    %v1635 = vpop.f32.mrb[0].mxu0
    %v1636 = vadd.f32 0.0, %v1635
    %v1637 = vpop.f32.mrb[0].mxu0
    %1638 = vmatprep.mubr.f32.mxu0 0.0
    %v1639 = vand.u32 %v1488, 4294901760
    %v1640 = vsub.f32 %v1488, %v1639
    %v1641 = vand.u32 %v1640, 4294901760
    %v1642 = vsub.f32 %v1640, %v1641
    %v1643 = vand.u32 %v1642, 4294901760
    %1644 = vmatmul.mubr.f32.gmra.mrb[0].mxu0 %v1643
    %v1645 = vpop.f32.mrb[0].mxu0
    %v1646 = vadd.f32 0.0, %v1645
    %v1647 = vpop.f32.mrb[0].mxu0
    %1648 = vmatprep.mubr.f32.mxu0 0.0
    %v1649 = vand.u32 %v1489, 4294901760
    %v1650 = vsub.f32 %v1489, %v1649
    %v1651 = vand.u32 %v1650, 4294901760
    %v1652 = vsub.f32 %v1650, %v1651
    %v1653 = vand.u32 %v1652, 4294901760
    %1654 = vmatmul.mubr.f32.gmra.mrb[0].mxu0 %v1653
    %v1655 = vpop.f32.mrb[0].mxu0
    %v1656 = vadd.f32 0.0, %v1655
    %v1657 = vpop.f32.mrb[0].mxu0
    %1658 = vmatprep.mubr.f32.mxu0 0.0
    %v1659 = vand.u32 %v1490, 4294901760
    %v1660 = vsub.f32 %v1490, %v1659
    %v1661 = vand.u32 %v1660, 4294901760
    %v1662 = vsub.f32 %v1660, %v1661
    %v1663 = vand.u32 %v1662, 4294901760
    %1664 = vmatmul.mubr.f32.gmra.mrb[0].mxu0 %v1663
    %v1665 = vpop.f32.mrb[0].mxu0
    %v1666 = vadd.f32 0.0, %v1665
    %v1667 = vpop.f32.mrb[0].mxu0
    %1668 = vmatprep.mubr.f32.mxu0 0.0
    %v1669 = vand.u32 %v1491, 4294901760
    %v1670 = vsub.f32 %v1491, %v1669
    %v1671 = vand.u32 %v1670, 4294901760
    %v1672 = vsub.f32 %v1670, %v1671
    %v1673 = vand.u32 %v1672, 4294901760
    %1674 = vmatmul.mubr.f32.gmra.mrb[0].mxu0 %v1673
    %v1675 = vpop.f32.mrb[0].mxu0
    %v1676 = vadd.f32 0.0, %v1675
    %v1677 = vpop.f32.mrb[0].mxu0
    %1678 = vmatprep.mubr.f32.mxu0 0.0
    %v1679 = vand.u32 %v1492, 4294901760
    %v1680 = vsub.f32 %v1492, %v1679
    %v1681 = vand.u32 %v1680, 4294901760
    %v1682 = vsub.f32 %v1680, %v1681
    %v1683 = vand.u32 %v1682, 4294901760
    %1684 = vmatmul.mubr.f32.gmra.mrb[0].mxu0 %v1683
    %v1685 = vpop.f32.mrb[0].mxu0
    %v1686 = vadd.f32 0.0, %v1685
    %v1687 = vpop.f32.mrb[0].mxu0
    %1688 = vmatprep.mubr.f32.mxu0 0.0
    %v1689 = vand.u32 %v1493, 4294901760
    %v1690 = vsub.f32 %v1493, %v1689
    %v1691 = vand.u32 %v1690, 4294901760
    %v1692 = vsub.f32 %v1690, %v1691
    %v1693 = vand.u32 %v1692, 4294901760
    %1694 = vmatmul.mubr.f32.gmra.mrb[0].mxu0 %v1693
    %v1695 = vpop.f32.mrb[0].mxu0
    %v1696 = vadd.f32 0.0, %v1695
    %v1697 = vpop.f32.mrb[0].mxu0
    %1698 = vmatprep.mubr.f32.mxu0 0.0
    %v1699 = vand.u32 %v1494, 4294901760
    %v1700 = vsub.f32 %v1494, %v1699
    %v1701 = vand.u32 %v1700, 4294901760
    %v1702 = vsub.f32 %v1700, %v1701
    %v1703 = vand.u32 %v1702, 4294901760
    %1704 = vmatmul.mubr.f32.gmra.mrb[0].mxu0 %v1703
    %v1705 = vpop.f32.mrb[0].mxu0
    %v1706 = vadd.f32 0.0, %v1705
    %v1707 = vpop.f32.mrb[0].mxu0
    %1708 = vmatprep.mubr.f32.mxu0 0.0
    %v1709 = vand.u32 %v1495, 4294901760
    %v1710 = vsub.f32 %v1495, %v1709
    %v1711 = vand.u32 %v1710, 4294901760
    %v1712 = vsub.f32 %v1710, %v1711
    %v1713 = vand.u32 %v1712, 4294901760
    %1714 = vmatmul.mubr.f32.gmra.mrb[0].mxu0 %v1713
    %v1715 = vpop.f32.mrb[0].mxu0
    %v1716 = vadd.f32 0.0, %v1715
    %v1717 = vpop.f32.mrb[0].mxu0
    %1718 = vmatprep.mubr.f32.mxu0 0.0
    %v1719 = vand.u32 %v1496, 4294901760
    %v1720 = vsub.f32 %v1496, %v1719
    %v1721 = vand.u32 %v1720, 4294901760
    %v1722 = vsub.f32 %v1720, %v1721
    %v1723 = vand.u32 %v1722, 4294901760
    %1724 = vmatmul.mubr.f32.gmra.mrb[0].mxu0 %v1723
    %v1725 = vpop.f32.mrb[0].mxu0
    %v1726 = vadd.f32 0.0, %v1725
    %v1727 = vpop.f32.mrb[0].mxu0
    %1728 = vmatprep.mubr.f32.mxu0 0.0
    %v1729 = vand.u32 %v1497, 4294901760
    %v1730 = vsub.f32 %v1497, %v1729
    %v1731 = vand.u32 %v1730, 4294901760
    %v1732 = vsub.f32 %v1730, %v1731
    %v1733 = vand.u32 %v1732, 4294901760
    %1734 = vmatmul.mubr.f32.gmra.mrb[0].mxu0 %v1733
    %v1735 = vpop.f32.mrb[0].mxu0
    %v1736 = vadd.f32 0.0, %v1735
    %v1737 = vpop.f32.mrb[0].mxu0
    %1738 = vdwg.mxu0
    %1739 = vmatprep.subr.mxu0 0.0
    %v1740 = vand.u32 %v164, 4294901760
    %v1741 = vsub.f32 %v164, %v1740
    %v1742 = vand.u32 %v1741, 4294901760
    %v1743 = vsub.f32 %v1741, %v1742
    %v1744 = vand.u32 %v1743, 4294901760
    %1745 = vmatpush1.msra.mxu0 %v1744
    %1746 = vmatprep.subr.mxu0 0.0
    %v1747 = vand.u32 %v165, 4294901760
    %v1748 = vsub.f32 %v165, %v1747
    %v1749 = vand.u32 %v1748, 4294901760
    %v1750 = vsub.f32 %v1748, %v1749
    %v1751 = vand.u32 %v1750, 4294901760
    %1752 = vmatpush1.msra.mxu0 %v1751
    %1753 = vmatprep.subr.mxu0 0.0
    %v1754 = vand.u32 %v166, 4294901760
    %v1755 = vsub.f32 %v166, %v1754
    %v1756 = vand.u32 %v1755, 4294901760
    %v1757 = vsub.f32 %v1755, %v1756
    %v1758 = vand.u32 %v1757, 4294901760
    %1759 = vmatpush1.msra.mxu0 %v1758
    %1760 = vmatprep.subr.mxu0 0.0
    %v1761 = vand.u32 %v167, 4294901760
    %v1762 = vsub.f32 %v167, %v1761
    %v1763 = vand.u32 %v1762, 4294901760
    %v1764 = vsub.f32 %v1762, %v1763
    %v1765 = vand.u32 %v1764, 4294901760
    %1766 = vmatpush1.msra.mxu0 %v1765
    %1767 = vmatprep.subr.mxu0 0.0
    %v1768 = vand.u32 %v168, 4294901760
    %v1769 = vsub.f32 %v168, %v1768
    %v1770 = vand.u32 %v1769, 4294901760
    %v1771 = vsub.f32 %v1769, %v1770
    %v1772 = vand.u32 %v1771, 4294901760
    %1773 = vmatpush1.msra.mxu0 %v1772
    %1774 = vmatprep.subr.mxu0 0.0
    %v1775 = vand.u32 %v169, 4294901760
    %v1776 = vsub.f32 %v169, %v1775
    %v1777 = vand.u32 %v1776, 4294901760
    %v1778 = vsub.f32 %v1776, %v1777
    %v1779 = vand.u32 %v1778, 4294901760
    %1780 = vmatpush1.msra.mxu0 %v1779
    %1781 = vmatprep.subr.mxu0 0.0
    %v1782 = vand.u32 %v170, 4294901760
    %v1783 = vsub.f32 %v170, %v1782
    %v1784 = vand.u32 %v1783, 4294901760
    %v1785 = vsub.f32 %v1783, %v1784
    %v1786 = vand.u32 %v1785, 4294901760
    %1787 = vmatpush1.msra.mxu0 %v1786
    %1788 = vmatprep.subr.mxu0 0.0
    %v1789 = vand.u32 %v171, 4294901760
    %v1790 = vsub.f32 %v171, %v1789
    %v1791 = vand.u32 %v1790, 4294901760
    %v1792 = vsub.f32 %v1790, %v1791
    %v1793 = vand.u32 %v1792, 4294901760
    %1794 = vmatpush1.msra.mxu0 %v1793
    %1795 = vmatprep.subr.mxu0 0.0
    %v1796 = vand.u32 %v172, 4294901760
    %v1797 = vsub.f32 %v172, %v1796
    %v1798 = vand.u32 %v1797, 4294901760
    %v1799 = vsub.f32 %v1797, %v1798
    %v1800 = vand.u32 %v1799, 4294901760
    %1801 = vmatpush1.msra.mxu0 %v1800
    %1802 = vmatprep.subr.mxu0 0.0
    %v1803 = vand.u32 %v173, 4294901760
    %v1804 = vsub.f32 %v173, %v1803
    %v1805 = vand.u32 %v1804, 4294901760
    %v1806 = vsub.f32 %v1804, %v1805
    %v1807 = vand.u32 %v1806, 4294901760
    %1808 = vmatpush1.msra.mxu0 %v1807
    %1809 = vmatprep.subr.mxu0 0.0
    %v1810 = vand.u32 %v174, 4294901760
    %v1811 = vsub.f32 %v174, %v1810
    %v1812 = vand.u32 %v1811, 4294901760
    %v1813 = vsub.f32 %v1811, %v1812
    %v1814 = vand.u32 %v1813, 4294901760
    %1815 = vmatpush1.msra.mxu0 %v1814
    %1816 = vmatprep.subr.mxu0 0.0
    %v1817 = vand.u32 %v175, 4294901760
    %v1818 = vsub.f32 %v175, %v1817
    %v1819 = vand.u32 %v1818, 4294901760
    %v1820 = vsub.f32 %v1818, %v1819
    %v1821 = vand.u32 %v1820, 4294901760
    %1822 = vmatpush1.msra.mxu0 %v1821
    %1823 = vmatprep.subr.mxu0 0.0
    %v1824 = vand.u32 %v176, 4294901760
    %v1825 = vsub.f32 %v176, %v1824
    %v1826 = vand.u32 %v1825, 4294901760
    %v1827 = vsub.f32 %v1825, %v1826
    %v1828 = vand.u32 %v1827, 4294901760
    %1829 = vmatpush1.msra.mxu0 %v1828
    %1830 = vmatprep.subr.mxu0 0.0
    %v1831 = vand.u32 %v177, 4294901760
    %v1832 = vsub.f32 %v177, %v1831
    %v1833 = vand.u32 %v1832, 4294901760
    %v1834 = vsub.f32 %v1832, %v1833
    %v1835 = vand.u32 %v1834, 4294901760
    %1836 = vmatpush1.msra.mxu0 %v1835
    %1837 = vmatprep.subr.mxu0 0.0
    %v1838 = vand.u32 %v178, 4294901760
    %v1839 = vsub.f32 %v178, %v1838
    %v1840 = vand.u32 %v1839, 4294901760
    %v1841 = vsub.f32 %v1839, %v1840
    %v1842 = vand.u32 %v1841, 4294901760
    %1843 = vmatpush1.msra.mxu0 %v1842
    %1844 = vmatprep.subr.mxu0 0.0
    %v1845 = vand.u32 %v179, 4294901760
    %v1846 = vsub.f32 %v179, %v1845
    %v1847 = vand.u32 %v1846, 4294901760
    %v1848 = vsub.f32 %v1846, %v1847
    %v1849 = vand.u32 %v1848, 4294901760
    %1850 = vmatpush1.msra.mxu0 %v1849
    %1851 = vmatprep.subr.mxu0 0.0
    %1852 = vmatpush1.msra.mxu0 0.0
    %1853 = vmatprep.subr.mxu0 0.0
    %1854 = vmatpush1.msra.mxu0 0.0
    %1855 = vmatprep.subr.mxu0 0.0
    %1856 = vmatpush1.msra.mxu0 0.0
    %1857 = vmatprep.subr.mxu0 0.0
    %1858 = vmatpush1.msra.mxu0 0.0
    %1859 = vmatprep.subr.mxu0 0.0
    %1860 = vmatpush1.msra.mxu0 0.0
    %1861 = vmatprep.subr.mxu0 0.0
    %1862 = vmatpush1.msra.mxu0 0.0
    %1863 = vmatprep.subr.mxu0 0.0
    %1864 = vmatpush1.msra.mxu0 0.0
    %1865 = vmatprep.subr.mxu0 0.0
    %1866 = vmatpush1.msra.mxu0 0.0
    %1867 = vmatprep.subr.mxu0 0.0
    %1868 = vmatpush1.msra.mxu0 0.0
    %1869 = vmatprep.subr.mxu0 0.0
    %1870 = vmatpush1.msra.mxu0 0.0
    %1871 = vmatprep.subr.mxu0 0.0
    %1872 = vmatpush1.msra.mxu0 0.0
    %1873 = vmatprep.subr.mxu0 0.0
    %1874 = vmatpush1.msra.mxu0 0.0
    %1875 = vmatprep.subr.mxu0 0.0
    %1876 = vmatpush1.msra.mxu0 0.0
    %1877 = vmatprep.subr.mxu0 0.0
    %1878 = vmatpush1.msra.mxu0 0.0
    %1879 = vmatprep.subr.mxu0 0.0
    %1880 = vmatpush1.msra.mxu0 0.0
    %1881 = vmatprep.subr.mxu0 0.0
    %1882 = vmatpush1.msra.mxu0 0.0
    %1883 = vmatprep.mubr.f32.mxu0 0.0
    %v1884 = vand.u32 %v1482, 4294901760
    %1885 = vmatmul.mubr.f32.gmra.mrb[0].mxu0 %v1884
    %v1886 = vpop.f32.mrb[0].mxu0
    %v1887 = vadd.f32 %v1586, %v1886
    %v1888 = vpop.f32.mrb[0].mxu0
    %1889 = vmatprep.mubr.f32.mxu0 0.0
    %v1890 = vand.u32 %v1483, 4294901760
    %1891 = vmatmul.mubr.f32.gmra.mrb[0].mxu0 %v1890
    %v1892 = vpop.f32.mrb[0].mxu0
    %v1893 = vadd.f32 %v1596, %v1892
    %v1894 = vpop.f32.mrb[0].mxu0
    %1895 = vmatprep.mubr.f32.mxu0 0.0
    %v1896 = vand.u32 %v1484, 4294901760
    %1897 = vmatmul.mubr.f32.gmra.mrb[0].mxu0 %v1896
    %v1898 = vpop.f32.mrb[0].mxu0
    %v1899 = vadd.f32 %v1606, %v1898
    %v1900 = vpop.f32.mrb[0].mxu0
    %1901 = vmatprep.mubr.f32.mxu0 0.0
    %v1902 = vand.u32 %v1485, 4294901760
    %1903 = vmatmul.mubr.f32.gmra.mrb[0].mxu0 %v1902
    %v1904 = vpop.f32.mrb[0].mxu0
    %v1905 = vadd.f32 %v1616, %v1904
    %v1906 = vpop.f32.mrb[0].mxu0
    %1907 = vmatprep.mubr.f32.mxu0 0.0
    %v1908 = vand.u32 %v1486, 4294901760
    %1909 = vmatmul.mubr.f32.gmra.mrb[0].mxu0 %v1908
    %v1910 = vpop.f32.mrb[0].mxu0
    %v1911 = vadd.f32 %v1626, %v1910
    %v1912 = vpop.f32.mrb[0].mxu0
    %1913 = vmatprep.mubr.f32.mxu0 0.0
    %v1914 = vand.u32 %v1487, 4294901760
    %1915 = vmatmul.mubr.f32.gmra.mrb[0].mxu0 %v1914
    %v1916 = vpop.f32.mrb[0].mxu0
    %v1917 = vadd.f32 %v1636, %v1916
    %v1918 = vpop.f32.mrb[0].mxu0
    %1919 = vmatprep.mubr.f32.mxu0 0.0
    %v1920 = vand.u32 %v1488, 4294901760
    %1921 = vmatmul.mubr.f32.gmra.mrb[0].mxu0 %v1920
    %v1922 = vpop.f32.mrb[0].mxu0
    %v1923 = vadd.f32 %v1646, %v1922
    %v1924 = vpop.f32.mrb[0].mxu0
    %1925 = vmatprep.mubr.f32.mxu0 0.0
    %v1926 = vand.u32 %v1489, 4294901760
    %1927 = vmatmul.mubr.f32.gmra.mrb[0].mxu0 %v1926
    %v1928 = vpop.f32.mrb[0].mxu0
    %v1929 = vadd.f32 %v1656, %v1928
    %v1930 = vpop.f32.mrb[0].mxu0
    %1931 = vmatprep.mubr.f32.mxu0 0.0
    %v1932 = vand.u32 %v1490, 4294901760
    %1933 = vmatmul.mubr.f32.gmra.mrb[0].mxu0 %v1932
    %v1934 = vpop.f32.mrb[0].mxu0
    %v1935 = vadd.f32 %v1666, %v1934
    %v1936 = vpop.f32.mrb[0].mxu0
    %1937 = vmatprep.mubr.f32.mxu0 0.0
    %v1938 = vand.u32 %v1491, 4294901760
    %1939 = vmatmul.mubr.f32.gmra.mrb[0].mxu0 %v1938
    %v1940 = vpop.f32.mrb[0].mxu0
    %v1941 = vadd.f32 %v1676, %v1940
    %v1942 = vpop.f32.mrb[0].mxu0
    %1943 = vmatprep.mubr.f32.mxu0 0.0
    %v1944 = vand.u32 %v1492, 4294901760
    %1945 = vmatmul.mubr.f32.gmra.mrb[0].mxu0 %v1944
    %v1946 = vpop.f32.mrb[0].mxu0
    %v1947 = vadd.f32 %v1686, %v1946
    %v1948 = vpop.f32.mrb[0].mxu0
    %1949 = vmatprep.mubr.f32.mxu0 0.0
    %v1950 = vand.u32 %v1493, 4294901760
    %1951 = vmatmul.mubr.f32.gmra.mrb[0].mxu0 %v1950
    %v1952 = vpop.f32.mrb[0].mxu0
    %v1953 = vadd.f32 %v1696, %v1952
    %v1954 = vpop.f32.mrb[0].mxu0
    %1955 = vmatprep.mubr.f32.mxu0 0.0
    %v1956 = vand.u32 %v1494, 4294901760
    %1957 = vmatmul.mubr.f32.gmra.mrb[0].mxu0 %v1956
    %v1958 = vpop.f32.mrb[0].mxu0
    %v1959 = vadd.f32 %v1706, %v1958
    %v1960 = vpop.f32.mrb[0].mxu0
    %1961 = vmatprep.mubr.f32.mxu0 0.0
    %v1962 = vand.u32 %v1495, 4294901760
    %1963 = vmatmul.mubr.f32.gmra.mrb[0].mxu0 %v1962
    %v1964 = vpop.f32.mrb[0].mxu0
    %v1965 = vadd.f32 %v1716, %v1964
    %v1966 = vpop.f32.mrb[0].mxu0
    %1967 = vmatprep.mubr.f32.mxu0 0.0
    %v1968 = vand.u32 %v1496, 4294901760
    %1969 = vmatmul.mubr.f32.gmra.mrb[0].mxu0 %v1968
    %v1970 = vpop.f32.mrb[0].mxu0
    %v1971 = vadd.f32 %v1726, %v1970
    %v1972 = vpop.f32.mrb[0].mxu0
    %1973 = vmatprep.mubr.f32.mxu0 0.0
    %v1974 = vand.u32 %v1497, 4294901760
    %1975 = vmatmul.mubr.f32.gmra.mrb[0].mxu0 %v1974
    %v1976 = vpop.f32.mrb[0].mxu0
    %v1977 = vadd.f32 %v1736, %v1976
    %v1978 = vpop.f32.mrb[0].mxu0
    %1979 = vdwg.mxu0
    %1980 = vmatprep.subr.mxu0 0.0
    %v1981 = vand.u32 %v164, 4294901760
    %v1982 = vsub.f32 %v164, %v1981
    %1983 = vmatpush1.msra.mxu0 %v1982
    %1984 = vmatprep.subr.mxu0 0.0
    %v1985 = vand.u32 %v165, 4294901760
    %v1986 = vsub.f32 %v165, %v1985
    %1987 = vmatpush1.msra.mxu0 %v1986
    %1988 = vmatprep.subr.mxu0 0.0
    %v1989 = vand.u32 %v166, 4294901760
    %v1990 = vsub.f32 %v166, %v1989
    %1991 = vmatpush1.msra.mxu0 %v1990
    %1992 = vmatprep.subr.mxu0 0.0
    %v1993 = vand.u32 %v167, 4294901760
    %v1994 = vsub.f32 %v167, %v1993
    %1995 = vmatpush1.msra.mxu0 %v1994
    %1996 = vmatprep.subr.mxu0 0.0
    %v1997 = vand.u32 %v168, 4294901760
    %v1998 = vsub.f32 %v168, %v1997
    %1999 = vmatpush1.msra.mxu0 %v1998
    %2000 = vmatprep.subr.mxu0 0.0
    %v2001 = vand.u32 %v169, 4294901760
    %v2002 = vsub.f32 %v169, %v2001
    %2003 = vmatpush1.msra.mxu0 %v2002
    %2004 = vmatprep.subr.mxu0 0.0
    %v2005 = vand.u32 %v170, 4294901760
    %v2006 = vsub.f32 %v170, %v2005
    %2007 = vmatpush1.msra.mxu0 %v2006
    %2008 = vmatprep.subr.mxu0 0.0
    %v2009 = vand.u32 %v171, 4294901760
    %v2010 = vsub.f32 %v171, %v2009
    %2011 = vmatpush1.msra.mxu0 %v2010
    %2012 = vmatprep.subr.mxu0 0.0
    %v2013 = vand.u32 %v172, 4294901760
    %v2014 = vsub.f32 %v172, %v2013
    %2015 = vmatpush1.msra.mxu0 %v2014
    %2016 = vmatprep.subr.mxu0 0.0
    %v2017 = vand.u32 %v173, 4294901760
    %v2018 = vsub.f32 %v173, %v2017
    %2019 = vmatpush1.msra.mxu0 %v2018
    %2020 = vmatprep.subr.mxu0 0.0
    %v2021 = vand.u32 %v174, 4294901760
    %v2022 = vsub.f32 %v174, %v2021
    %2023 = vmatpush1.msra.mxu0 %v2022
    %2024 = vmatprep.subr.mxu0 0.0
    %v2025 = vand.u32 %v175, 4294901760
    %v2026 = vsub.f32 %v175, %v2025
    %2027 = vmatpush1.msra.mxu0 %v2026
    %2028 = vmatprep.subr.mxu0 0.0
    %v2029 = vand.u32 %v176, 4294901760
    %v2030 = vsub.f32 %v176, %v2029
    %2031 = vmatpush1.msra.mxu0 %v2030
    %2032 = vmatprep.subr.mxu0 0.0
    %v2033 = vand.u32 %v177, 4294901760
    %v2034 = vsub.f32 %v177, %v2033
    %2035 = vmatpush1.msra.mxu0 %v2034
    %2036 = vmatprep.subr.mxu0 0.0
    %v2037 = vand.u32 %v178, 4294901760
    %v2038 = vsub.f32 %v178, %v2037
    %2039 = vmatpush1.msra.mxu0 %v2038
    %2040 = vmatprep.subr.mxu0 0.0
    %v2041 = vand.u32 %v179, 4294901760
    %v2042 = vsub.f32 %v179, %v2041
    %2043 = vmatpush1.msra.mxu0 %v2042
    %2044 = vmatprep.subr.mxu0 0.0
    %2045 = vmatpush1.msra.mxu0 0.0
    %2046 = vmatprep.subr.mxu0 0.0
    %2047 = vmatpush1.msra.mxu0 0.0
    %2048 = vmatprep.subr.mxu0 0.0
    %2049 = vmatpush1.msra.mxu0 0.0
    %2050 = vmatprep.subr.mxu0 0.0
    %2051 = vmatpush1.msra.mxu0 0.0
    %2052 = vmatprep.subr.mxu0 0.0
    %2053 = vmatpush1.msra.mxu0 0.0
    %2054 = vmatprep.subr.mxu0 0.0
    %2055 = vmatpush1.msra.mxu0 0.0
    %2056 = vmatprep.subr.mxu0 0.0
    %2057 = vmatpush1.msra.mxu0 0.0
    %2058 = vmatprep.subr.mxu0 0.0
    %2059 = vmatpush1.msra.mxu0 0.0
    %2060 = vmatprep.subr.mxu0 0.0
    %2061 = vmatpush1.msra.mxu0 0.0
    %2062 = vmatprep.subr.mxu0 0.0
    %2063 = vmatpush1.msra.mxu0 0.0
    %2064 = vmatprep.subr.mxu0 0.0
    %2065 = vmatpush1.msra.mxu0 0.0
    %2066 = vmatprep.subr.mxu0 0.0
    %2067 = vmatpush1.msra.mxu0 0.0
    %2068 = vmatprep.subr.mxu0 0.0
    %2069 = vmatpush1.msra.mxu0 0.0
    %2070 = vmatprep.subr.mxu0 0.0
    %2071 = vmatpush1.msra.mxu0 0.0
    %2072 = vmatprep.subr.mxu0 0.0
    %2073 = vmatpush1.msra.mxu0 0.0
    %2074 = vmatprep.subr.mxu0 0.0
    %2075 = vmatpush1.msra.mxu0 0.0
    %2076 = vmatprep.mubr.f32.mxu0 0.0
    %v2077 = vand.u32 %v1482, 4294901760
    %v2078 = vsub.f32 %v1482, %v2077
    %2079 = vmatmul.mubr.f32.gmra.mrb[0].mxu0 %v2078
    %v2080 = vpop.f32.mrb[0].mxu0
    %v2081 = vadd.f32 %v1887, %v2080
    %v2082 = vpop.f32.mrb[0].mxu0
    %2083 = vmatprep.mubr.f32.mxu0 0.0
    %v2084 = vand.u32 %v1483, 4294901760
    %v2085 = vsub.f32 %v1483, %v2084
    %2086 = vmatmul.mubr.f32.gmra.mrb[0].mxu0 %v2085
    %v2087 = vpop.f32.mrb[0].mxu0
    %v2088 = vadd.f32 %v1893, %v2087
    %v2089 = vpop.f32.mrb[0].mxu0
    %2090 = vmatprep.mubr.f32.mxu0 0.0
    %v2091 = vand.u32 %v1484, 4294901760
    %v2092 = vsub.f32 %v1484, %v2091
    %2093 = vmatmul.mubr.f32.gmra.mrb[0].mxu0 %v2092
    %v2094 = vpop.f32.mrb[0].mxu0
    %v2095 = vadd.f32 %v1899, %v2094
    %v2096 = vpop.f32.mrb[0].mxu0
    %2097 = vmatprep.mubr.f32.mxu0 0.0
    %v2098 = vand.u32 %v1485, 4294901760
    %v2099 = vsub.f32 %v1485, %v2098
    %2100 = vmatmul.mubr.f32.gmra.mrb[0].mxu0 %v2099
    %v2101 = vpop.f32.mrb[0].mxu0
    %v2102 = vadd.f32 %v1905, %v2101
    %v2103 = vpop.f32.mrb[0].mxu0
    %2104 = vmatprep.mubr.f32.mxu0 0.0
    %v2105 = vand.u32 %v1486, 4294901760
    %v2106 = vsub.f32 %v1486, %v2105
    %2107 = vmatmul.mubr.f32.gmra.mrb[0].mxu0 %v2106
    %v2108 = vpop.f32.mrb[0].mxu0
    %v2109 = vadd.f32 %v1911, %v2108
    %v2110 = vpop.f32.mrb[0].mxu0
    %2111 = vmatprep.mubr.f32.mxu0 0.0
    %v2112 = vand.u32 %v1487, 4294901760
    %v2113 = vsub.f32 %v1487, %v2112
    %2114 = vmatmul.mubr.f32.gmra.mrb[0].mxu0 %v2113
    %v2115 = vpop.f32.mrb[0].mxu0
    %v2116 = vadd.f32 %v1917, %v2115
    %v2117 = vpop.f32.mrb[0].mxu0
    %2118 = vmatprep.mubr.f32.mxu0 0.0
    %v2119 = vand.u32 %v1488, 4294901760
    %v2120 = vsub.f32 %v1488, %v2119
    %2121 = vmatmul.mubr.f32.gmra.mrb[0].mxu0 %v2120
    %v2122 = vpop.f32.mrb[0].mxu0
    %v2123 = vadd.f32 %v1923, %v2122
    %v2124 = vpop.f32.mrb[0].mxu0
    %2125 = vmatprep.mubr.f32.mxu0 0.0
    %v2126 = vand.u32 %v1489, 4294901760
    %v2127 = vsub.f32 %v1489, %v2126
    %2128 = vmatmul.mubr.f32.gmra.mrb[0].mxu0 %v2127
    %v2129 = vpop.f32.mrb[0].mxu0
    %v2130 = vadd.f32 %v1929, %v2129
    %v2131 = vpop.f32.mrb[0].mxu0
    %2132 = vmatprep.mubr.f32.mxu0 0.0
    %v2133 = vand.u32 %v1490, 4294901760
    %v2134 = vsub.f32 %v1490, %v2133
    %2135 = vmatmul.mubr.f32.gmra.mrb[0].mxu0 %v2134
    %v2136 = vpop.f32.mrb[0].mxu0
    %v2137 = vadd.f32 %v1935, %v2136
    %v2138 = vpop.f32.mrb[0].mxu0
    %2139 = vmatprep.mubr.f32.mxu0 0.0
    %v2140 = vand.u32 %v1491, 4294901760
    %v2141 = vsub.f32 %v1491, %v2140
    %2142 = vmatmul.mubr.f32.gmra.mrb[0].mxu0 %v2141
    %v2143 = vpop.f32.mrb[0].mxu0
    %v2144 = vadd.f32 %v1941, %v2143
    %v2145 = vpop.f32.mrb[0].mxu0
    %2146 = vmatprep.mubr.f32.mxu0 0.0
    %v2147 = vand.u32 %v1492, 4294901760
    %v2148 = vsub.f32 %v1492, %v2147
    %2149 = vmatmul.mubr.f32.gmra.mrb[0].mxu0 %v2148
    %v2150 = vpop.f32.mrb[0].mxu0
    %v2151 = vadd.f32 %v1947, %v2150
    %v2152 = vpop.f32.mrb[0].mxu0
    %2153 = vmatprep.mubr.f32.mxu0 0.0
    %v2154 = vand.u32 %v1493, 4294901760
    %v2155 = vsub.f32 %v1493, %v2154
    %2156 = vmatmul.mubr.f32.gmra.mrb[0].mxu0 %v2155
    %v2157 = vpop.f32.mrb[0].mxu0
    %v2158 = vadd.f32 %v1953, %v2157
    %v2159 = vpop.f32.mrb[0].mxu0
    %2160 = vmatprep.mubr.f32.mxu0 0.0
    %v2161 = vand.u32 %v1494, 4294901760
    %v2162 = vsub.f32 %v1494, %v2161
    %2163 = vmatmul.mubr.f32.gmra.mrb[0].mxu0 %v2162
    %v2164 = vpop.f32.mrb[0].mxu0
    %v2165 = vadd.f32 %v1959, %v2164
    %v2166 = vpop.f32.mrb[0].mxu0
    %2167 = vmatprep.mubr.f32.mxu0 0.0
    %v2168 = vand.u32 %v1495, 4294901760
    %v2169 = vsub.f32 %v1495, %v2168
    %2170 = vmatmul.mubr.f32.gmra.mrb[0].mxu0 %v2169
    %v2171 = vpop.f32.mrb[0].mxu0
    %v2172 = vadd.f32 %v1965, %v2171
    %v2173 = vpop.f32.mrb[0].mxu0
    %2174 = vmatprep.mubr.f32.mxu0 0.0
    %v2175 = vand.u32 %v1496, 4294901760
    %v2176 = vsub.f32 %v1496, %v2175
    %2177 = vmatmul.mubr.f32.gmra.mrb[0].mxu0 %v2176
    %v2178 = vpop.f32.mrb[0].mxu0
    %v2179 = vadd.f32 %v1971, %v2178
    %v2180 = vpop.f32.mrb[0].mxu0
    %2181 = vmatprep.mubr.f32.mxu0 0.0
    %v2182 = vand.u32 %v1497, 4294901760
    %v2183 = vsub.f32 %v1497, %v2182
    %2184 = vmatmul.mubr.f32.gmra.mrb[0].mxu0 %v2183
    %v2185 = vpop.f32.mrb[0].mxu0
    %v2186 = vadd.f32 %v1977, %v2185
    %v2187 = vpop.f32.mrb[0].mxu0
    %2188 = vdwg.mxu0
    %2189 = vmatprep.subr.mxu0 0.0
    %v2190 = vand.u32 %v164, 4294901760
    %2191 = vmatpush1.msra.mxu0 %v2190
    %2192 = vmatprep.subr.mxu0 0.0
    %v2193 = vand.u32 %v165, 4294901760
    %2194 = vmatpush1.msra.mxu0 %v2193
    %2195 = vmatprep.subr.mxu0 0.0
    %v2196 = vand.u32 %v166, 4294901760
    %2197 = vmatpush1.msra.mxu0 %v2196
    %2198 = vmatprep.subr.mxu0 0.0
    %v2199 = vand.u32 %v167, 4294901760
    %2200 = vmatpush1.msra.mxu0 %v2199
    %2201 = vmatprep.subr.mxu0 0.0
    %v2202 = vand.u32 %v168, 4294901760
    %2203 = vmatpush1.msra.mxu0 %v2202
    %2204 = vmatprep.subr.mxu0 0.0
    %v2205 = vand.u32 %v169, 4294901760
    %2206 = vmatpush1.msra.mxu0 %v2205
    %2207 = vmatprep.subr.mxu0 0.0
    %v2208 = vand.u32 %v170, 4294901760
    %2209 = vmatpush1.msra.mxu0 %v2208
    %2210 = vmatprep.subr.mxu0 0.0
    %v2211 = vand.u32 %v171, 4294901760
    %2212 = vmatpush1.msra.mxu0 %v2211
    %2213 = vmatprep.subr.mxu0 0.0
    %v2214 = vand.u32 %v172, 4294901760
    %2215 = vmatpush1.msra.mxu0 %v2214
    %2216 = vmatprep.subr.mxu0 0.0
    %v2217 = vand.u32 %v173, 4294901760
    %2218 = vmatpush1.msra.mxu0 %v2217
    %2219 = vmatprep.subr.mxu0 0.0
    %v2220 = vand.u32 %v174, 4294901760
    %2221 = vmatpush1.msra.mxu0 %v2220
    %2222 = vmatprep.subr.mxu0 0.0
    %v2223 = vand.u32 %v175, 4294901760
    %2224 = vmatpush1.msra.mxu0 %v2223
    %2225 = vmatprep.subr.mxu0 0.0
    %v2226 = vand.u32 %v176, 4294901760
    %2227 = vmatpush1.msra.mxu0 %v2226
    %2228 = vmatprep.subr.mxu0 0.0
    %v2229 = vand.u32 %v177, 4294901760
    %2230 = vmatpush1.msra.mxu0 %v2229
    %2231 = vmatprep.subr.mxu0 0.0
    %v2232 = vand.u32 %v178, 4294901760
    %2233 = vmatpush1.msra.mxu0 %v2232
    %2234 = vmatprep.subr.mxu0 0.0
    %v2235 = vand.u32 %v179, 4294901760
    %2236 = vmatpush1.msra.mxu0 %v2235
    %2237 = vmatprep.subr.mxu0 0.0
    %2238 = vmatpush1.msra.mxu0 0.0
    %2239 = vmatprep.subr.mxu0 0.0
    %2240 = vmatpush1.msra.mxu0 0.0
    %2241 = vmatprep.subr.mxu0 0.0
    %2242 = vmatpush1.msra.mxu0 0.0
    %2243 = vmatprep.subr.mxu0 0.0
    %2244 = vmatpush1.msra.mxu0 0.0
    %2245 = vmatprep.subr.mxu0 0.0
    %2246 = vmatpush1.msra.mxu0 0.0
    %2247 = vmatprep.subr.mxu0 0.0
    %2248 = vmatpush1.msra.mxu0 0.0
    %2249 = vmatprep.subr.mxu0 0.0
    %2250 = vmatpush1.msra.mxu0 0.0
    %2251 = vmatprep.subr.mxu0 0.0
    %2252 = vmatpush1.msra.mxu0 0.0
    %2253 = vmatprep.subr.mxu0 0.0
    %2254 = vmatpush1.msra.mxu0 0.0
    %2255 = vmatprep.subr.mxu0 0.0
    %2256 = vmatpush1.msra.mxu0 0.0
    %2257 = vmatprep.subr.mxu0 0.0
    %2258 = vmatpush1.msra.mxu0 0.0
    %2259 = vmatprep.subr.mxu0 0.0
    %2260 = vmatpush1.msra.mxu0 0.0
    %2261 = vmatprep.subr.mxu0 0.0
    %2262 = vmatpush1.msra.mxu0 0.0
    %2263 = vmatprep.subr.mxu0 0.0
    %2264 = vmatpush1.msra.mxu0 0.0
    %2265 = vmatprep.subr.mxu0 0.0
    %2266 = vmatpush1.msra.mxu0 0.0
    %2267 = vmatprep.subr.mxu0 0.0
    %2268 = vmatpush1.msra.mxu0 0.0
    %2269 = vmatprep.mubr.f32.mxu0 0.0
    %v2270 = vand.u32 %v1482, 4294901760
    %v2271 = vsub.f32 %v1482, %v2270
    %v2272 = vand.u32 %v2271, 4294901760
    %2273 = vmatmul.mubr.f32.gmra.mrb[0].mxu0 %v2272
    %v2274 = vpop.f32.mrb[0].mxu0
    %v2275 = vadd.f32 %v2081, %v2274
    %v2276 = vpop.f32.mrb[0].mxu0
    %2277 = vmatprep.mubr.f32.mxu0 0.0
    %v2278 = vand.u32 %v1483, 4294901760
    %v2279 = vsub.f32 %v1483, %v2278
    %v2280 = vand.u32 %v2279, 4294901760
    %2281 = vmatmul.mubr.f32.gmra.mrb[0].mxu0 %v2280
    %v2282 = vpop.f32.mrb[0].mxu0
    %v2283 = vadd.f32 %v2088, %v2282
    %v2284 = vpop.f32.mrb[0].mxu0
    %2285 = vmatprep.mubr.f32.mxu0 0.0
    %v2286 = vand.u32 %v1484, 4294901760
    %v2287 = vsub.f32 %v1484, %v2286
    %v2288 = vand.u32 %v2287, 4294901760
    %2289 = vmatmul.mubr.f32.gmra.mrb[0].mxu0 %v2288
    %v2290 = vpop.f32.mrb[0].mxu0
    %v2291 = vadd.f32 %v2095, %v2290
    %v2292 = vpop.f32.mrb[0].mxu0
    %2293 = vmatprep.mubr.f32.mxu0 0.0
    %v2294 = vand.u32 %v1485, 4294901760
    %v2295 = vsub.f32 %v1485, %v2294
    %v2296 = vand.u32 %v2295, 4294901760
    %2297 = vmatmul.mubr.f32.gmra.mrb[0].mxu0 %v2296
    %v2298 = vpop.f32.mrb[0].mxu0
    %v2299 = vadd.f32 %v2102, %v2298
    %v2300 = vpop.f32.mrb[0].mxu0
    %2301 = vmatprep.mubr.f32.mxu0 0.0
    %v2302 = vand.u32 %v1486, 4294901760
    %v2303 = vsub.f32 %v1486, %v2302
    %v2304 = vand.u32 %v2303, 4294901760
    %2305 = vmatmul.mubr.f32.gmra.mrb[0].mxu0 %v2304
    %v2306 = vpop.f32.mrb[0].mxu0
    %v2307 = vadd.f32 %v2109, %v2306
    %v2308 = vpop.f32.mrb[0].mxu0
    %2309 = vmatprep.mubr.f32.mxu0 0.0
    %v2310 = vand.u32 %v1487, 4294901760
    %v2311 = vsub.f32 %v1487, %v2310
    %v2312 = vand.u32 %v2311, 4294901760
    %2313 = vmatmul.mubr.f32.gmra.mrb[0].mxu0 %v2312
    %v2314 = vpop.f32.mrb[0].mxu0
    %v2315 = vadd.f32 %v2116, %v2314
    %v2316 = vpop.f32.mrb[0].mxu0
    %2317 = vmatprep.mubr.f32.mxu0 0.0
    %v2318 = vand.u32 %v1488, 4294901760
    %v2319 = vsub.f32 %v1488, %v2318
    %v2320 = vand.u32 %v2319, 4294901760
    %2321 = vmatmul.mubr.f32.gmra.mrb[0].mxu0 %v2320
    %v2322 = vpop.f32.mrb[0].mxu0
    %v2323 = vadd.f32 %v2123, %v2322
    %v2324 = vpop.f32.mrb[0].mxu0
    %2325 = vmatprep.mubr.f32.mxu0 0.0
    %v2326 = vand.u32 %v1489, 4294901760
    %v2327 = vsub.f32 %v1489, %v2326
    %v2328 = vand.u32 %v2327, 4294901760
    %2329 = vmatmul.mubr.f32.gmra.mrb[0].mxu0 %v2328
    %v2330 = vpop.f32.mrb[0].mxu0
    %v2331 = vadd.f32 %v2130, %v2330
    %v2332 = vpop.f32.mrb[0].mxu0
    %2333 = vmatprep.mubr.f32.mxu0 0.0
    %v2334 = vand.u32 %v1490, 4294901760
    %v2335 = vsub.f32 %v1490, %v2334
    %v2336 = vand.u32 %v2335, 4294901760
    %2337 = vmatmul.mubr.f32.gmra.mrb[0].mxu0 %v2336
    %v2338 = vpop.f32.mrb[0].mxu0
    %v2339 = vadd.f32 %v2137, %v2338
    %v2340 = vpop.f32.mrb[0].mxu0
    %2341 = vmatprep.mubr.f32.mxu0 0.0
    %v2342 = vand.u32 %v1491, 4294901760
    %v2343 = vsub.f32 %v1491, %v2342
    %v2344 = vand.u32 %v2343, 4294901760
    %2345 = vmatmul.mubr.f32.gmra.mrb[0].mxu0 %v2344
    %v2346 = vpop.f32.mrb[0].mxu0
    %v2347 = vadd.f32 %v2144, %v2346
    %v2348 = vpop.f32.mrb[0].mxu0
    %2349 = vmatprep.mubr.f32.mxu0 0.0
    %v2350 = vand.u32 %v1492, 4294901760
    %v2351 = vsub.f32 %v1492, %v2350
    %v2352 = vand.u32 %v2351, 4294901760
    %2353 = vmatmul.mubr.f32.gmra.mrb[0].mxu0 %v2352
    %v2354 = vpop.f32.mrb[0].mxu0
    %v2355 = vadd.f32 %v2151, %v2354
    %v2356 = vpop.f32.mrb[0].mxu0
    %2357 = vmatprep.mubr.f32.mxu0 0.0
    %v2358 = vand.u32 %v1493, 4294901760
    %v2359 = vsub.f32 %v1493, %v2358
    %v2360 = vand.u32 %v2359, 4294901760
    %2361 = vmatmul.mubr.f32.gmra.mrb[0].mxu0 %v2360
    %v2362 = vpop.f32.mrb[0].mxu0
    %v2363 = vadd.f32 %v2158, %v2362
    %v2364 = vpop.f32.mrb[0].mxu0
    %2365 = vmatprep.mubr.f32.mxu0 0.0
    %v2366 = vand.u32 %v1494, 4294901760
    %v2367 = vsub.f32 %v1494, %v2366
    %v2368 = vand.u32 %v2367, 4294901760
    %2369 = vmatmul.mubr.f32.gmra.mrb[0].mxu0 %v2368
    %v2370 = vpop.f32.mrb[0].mxu0
    %v2371 = vadd.f32 %v2165, %v2370
    %v2372 = vpop.f32.mrb[0].mxu0
    %2373 = vmatprep.mubr.f32.mxu0 0.0
    %v2374 = vand.u32 %v1495, 4294901760
    %v2375 = vsub.f32 %v1495, %v2374
    %v2376 = vand.u32 %v2375, 4294901760
    %2377 = vmatmul.mubr.f32.gmra.mrb[0].mxu0 %v2376
    %v2378 = vpop.f32.mrb[0].mxu0
    %v2379 = vadd.f32 %v2172, %v2378
    %v2380 = vpop.f32.mrb[0].mxu0
    %2381 = vmatprep.mubr.f32.mxu0 0.0
    %v2382 = vand.u32 %v1496, 4294901760
    %v2383 = vsub.f32 %v1496, %v2382
    %v2384 = vand.u32 %v2383, 4294901760
    %2385 = vmatmul.mubr.f32.gmra.mrb[0].mxu0 %v2384
    %v2386 = vpop.f32.mrb[0].mxu0
    %v2387 = vadd.f32 %v2179, %v2386
    %v2388 = vpop.f32.mrb[0].mxu0
    %2389 = vmatprep.mubr.f32.mxu0 0.0
    %v2390 = vand.u32 %v1497, 4294901760
    %v2391 = vsub.f32 %v1497, %v2390
    %v2392 = vand.u32 %v2391, 4294901760
    %2393 = vmatmul.mubr.f32.gmra.mrb[0].mxu0 %v2392
    %v2394 = vpop.f32.mrb[0].mxu0
    %v2395 = vadd.f32 %v2186, %v2394
    %v2396 = vpop.f32.mrb[0].mxu0
    %2397 = vdwg.mxu0
    %2398 = vmatprep.subr.mxu0 0.0
    %v2399 = vand.u32 %v164, 4294901760
    %v2400 = vsub.f32 %v164, %v2399
    %v2401 = vand.u32 %v2400, 4294901760
    %2402 = vmatpush1.msra.mxu0 %v2401
    %2403 = vmatprep.subr.mxu0 0.0
    %v2404 = vand.u32 %v165, 4294901760
    %v2405 = vsub.f32 %v165, %v2404
    %v2406 = vand.u32 %v2405, 4294901760
    %2407 = vmatpush1.msra.mxu0 %v2406
    %2408 = vmatprep.subr.mxu0 0.0
    %v2409 = vand.u32 %v166, 4294901760
    %v2410 = vsub.f32 %v166, %v2409
    %v2411 = vand.u32 %v2410, 4294901760
    %2412 = vmatpush1.msra.mxu0 %v2411
    %2413 = vmatprep.subr.mxu0 0.0
    %v2414 = vand.u32 %v167, 4294901760
    %v2415 = vsub.f32 %v167, %v2414
    %v2416 = vand.u32 %v2415, 4294901760
    %2417 = vmatpush1.msra.mxu0 %v2416
    %2418 = vmatprep.subr.mxu0 0.0
    %v2419 = vand.u32 %v168, 4294901760
    %v2420 = vsub.f32 %v168, %v2419
    %v2421 = vand.u32 %v2420, 4294901760
    %2422 = vmatpush1.msra.mxu0 %v2421
    %2423 = vmatprep.subr.mxu0 0.0
    %v2424 = vand.u32 %v169, 4294901760
    %v2425 = vsub.f32 %v169, %v2424
    %v2426 = vand.u32 %v2425, 4294901760
    %2427 = vmatpush1.msra.mxu0 %v2426
    %2428 = vmatprep.subr.mxu0 0.0
    %v2429 = vand.u32 %v170, 4294901760
    %v2430 = vsub.f32 %v170, %v2429
    %v2431 = vand.u32 %v2430, 4294901760
    %2432 = vmatpush1.msra.mxu0 %v2431
    %2433 = vmatprep.subr.mxu0 0.0
    %v2434 = vand.u32 %v171, 4294901760
    %v2435 = vsub.f32 %v171, %v2434
    %v2436 = vand.u32 %v2435, 4294901760
    %2437 = vmatpush1.msra.mxu0 %v2436
    %2438 = vmatprep.subr.mxu0 0.0
    %v2439 = vand.u32 %v172, 4294901760
    %v2440 = vsub.f32 %v172, %v2439
    %v2441 = vand.u32 %v2440, 4294901760
    %2442 = vmatpush1.msra.mxu0 %v2441
    %2443 = vmatprep.subr.mxu0 0.0
    %v2444 = vand.u32 %v173, 4294901760
    %v2445 = vsub.f32 %v173, %v2444
    %v2446 = vand.u32 %v2445, 4294901760
    %2447 = vmatpush1.msra.mxu0 %v2446
    %2448 = vmatprep.subr.mxu0 0.0
    %v2449 = vand.u32 %v174, 4294901760
    %v2450 = vsub.f32 %v174, %v2449
    %v2451 = vand.u32 %v2450, 4294901760
    %2452 = vmatpush1.msra.mxu0 %v2451
    %2453 = vmatprep.subr.mxu0 0.0
    %v2454 = vand.u32 %v175, 4294901760
    %v2455 = vsub.f32 %v175, %v2454
    %v2456 = vand.u32 %v2455, 4294901760
    %2457 = vmatpush1.msra.mxu0 %v2456
    %2458 = vmatprep.subr.mxu0 0.0
    %v2459 = vand.u32 %v176, 4294901760
    %v2460 = vsub.f32 %v176, %v2459
    %v2461 = vand.u32 %v2460, 4294901760
    %2462 = vmatpush1.msra.mxu0 %v2461
    %2463 = vmatprep.subr.mxu0 0.0
    %v2464 = vand.u32 %v177, 4294901760
    %v2465 = vsub.f32 %v177, %v2464
    %v2466 = vand.u32 %v2465, 4294901760
    %2467 = vmatpush1.msra.mxu0 %v2466
    %2468 = vmatprep.subr.mxu0 0.0
    %v2469 = vand.u32 %v178, 4294901760
    %v2470 = vsub.f32 %v178, %v2469
    %v2471 = vand.u32 %v2470, 4294901760
    %2472 = vmatpush1.msra.mxu0 %v2471
    %2473 = vmatprep.subr.mxu0 0.0
    %v2474 = vand.u32 %v179, 4294901760
    %v2475 = vsub.f32 %v179, %v2474
    %v2476 = vand.u32 %v2475, 4294901760
    %2477 = vmatpush1.msra.mxu0 %v2476
    %2478 = vmatprep.subr.mxu0 0.0
    %2479 = vmatpush1.msra.mxu0 0.0
    %2480 = vmatprep.subr.mxu0 0.0
    %2481 = vmatpush1.msra.mxu0 0.0
    %2482 = vmatprep.subr.mxu0 0.0
    %2483 = vmatpush1.msra.mxu0 0.0
    %2484 = vmatprep.subr.mxu0 0.0
    %2485 = vmatpush1.msra.mxu0 0.0
    %2486 = vmatprep.subr.mxu0 0.0
    %2487 = vmatpush1.msra.mxu0 0.0
    %2488 = vmatprep.subr.mxu0 0.0
    %2489 = vmatpush1.msra.mxu0 0.0
    %2490 = vmatprep.subr.mxu0 0.0
    %2491 = vmatpush1.msra.mxu0 0.0
    %2492 = vmatprep.subr.mxu0 0.0
    %2493 = vmatpush1.msra.mxu0 0.0
    %2494 = vmatprep.subr.mxu0 0.0
    %2495 = vmatpush1.msra.mxu0 0.0
    %2496 = vmatprep.subr.mxu0 0.0
    %2497 = vmatpush1.msra.mxu0 0.0
    %2498 = vmatprep.subr.mxu0 0.0
    %2499 = vmatpush1.msra.mxu0 0.0
    %2500 = vmatprep.subr.mxu0 0.0
    %2501 = vmatpush1.msra.mxu0 0.0
    %2502 = vmatprep.subr.mxu0 0.0
    %2503 = vmatpush1.msra.mxu0 0.0
    %2504 = vmatprep.subr.mxu0 0.0
    %2505 = vmatpush1.msra.mxu0 0.0
    %2506 = vmatprep.subr.mxu0 0.0
    %2507 = vmatpush1.msra.mxu0 0.0
    %2508 = vmatprep.subr.mxu0 0.0
    %2509 = vmatpush1.msra.mxu0 0.0
    %2510 = vmatprep.mubr.f32.mxu0 0.0
    %v2511 = vand.u32 %v1482, 4294901760
    %2512 = vmatmul.mubr.f32.gmra.mrb[0].mxu0 %v2511
    %v2513 = vpop.f32.mrb[0].mxu0
    %v2514 = vadd.f32 %v2275, %v2513
    %v2515 = vpop.f32.mrb[0].mxu0
    %2516 = vmatprep.mubr.f32.mxu0 0.0
    %v2517 = vand.u32 %v1483, 4294901760
    %2518 = vmatmul.mubr.f32.gmra.mrb[0].mxu0 %v2517
    %v2519 = vpop.f32.mrb[0].mxu0
    %v2520 = vadd.f32 %v2283, %v2519
    %v2521 = vpop.f32.mrb[0].mxu0
    %2522 = vmatprep.mubr.f32.mxu0 0.0
    %v2523 = vand.u32 %v1484, 4294901760
    %2524 = vmatmul.mubr.f32.gmra.mrb[0].mxu0 %v2523
    %v2525 = vpop.f32.mrb[0].mxu0
    %v2526 = vadd.f32 %v2291, %v2525
    %v2527 = vpop.f32.mrb[0].mxu0
    %2528 = vmatprep.mubr.f32.mxu0 0.0
    %v2529 = vand.u32 %v1485, 4294901760
    %2530 = vmatmul.mubr.f32.gmra.mrb[0].mxu0 %v2529
    %v2531 = vpop.f32.mrb[0].mxu0
    %v2532 = vadd.f32 %v2299, %v2531
    %v2533 = vpop.f32.mrb[0].mxu0
    %2534 = vmatprep.mubr.f32.mxu0 0.0
    %v2535 = vand.u32 %v1486, 4294901760
    %2536 = vmatmul.mubr.f32.gmra.mrb[0].mxu0 %v2535
    %v2537 = vpop.f32.mrb[0].mxu0
    %v2538 = vadd.f32 %v2307, %v2537
    %v2539 = vpop.f32.mrb[0].mxu0
    %2540 = vmatprep.mubr.f32.mxu0 0.0
    %v2541 = vand.u32 %v1487, 4294901760
    %2542 = vmatmul.mubr.f32.gmra.mrb[0].mxu0 %v2541
    %v2543 = vpop.f32.mrb[0].mxu0
    %v2544 = vadd.f32 %v2315, %v2543
    %v2545 = vpop.f32.mrb[0].mxu0
    %2546 = vmatprep.mubr.f32.mxu0 0.0
    %v2547 = vand.u32 %v1488, 4294901760
    %2548 = vmatmul.mubr.f32.gmra.mrb[0].mxu0 %v2547
    %v2549 = vpop.f32.mrb[0].mxu0
    %v2550 = vadd.f32 %v2323, %v2549
    %v2551 = vpop.f32.mrb[0].mxu0
    %2552 = vmatprep.mubr.f32.mxu0 0.0
    %v2553 = vand.u32 %v1489, 4294901760
    %2554 = vmatmul.mubr.f32.gmra.mrb[0].mxu0 %v2553
    %v2555 = vpop.f32.mrb[0].mxu0
    %v2556 = vadd.f32 %v2331, %v2555
    %v2557 = vpop.f32.mrb[0].mxu0
    %2558 = vmatprep.mubr.f32.mxu0 0.0
    %v2559 = vand.u32 %v1490, 4294901760
    %2560 = vmatmul.mubr.f32.gmra.mrb[0].mxu0 %v2559
    %v2561 = vpop.f32.mrb[0].mxu0
    %v2562 = vadd.f32 %v2339, %v2561
    %v2563 = vpop.f32.mrb[0].mxu0
    %2564 = vmatprep.mubr.f32.mxu0 0.0
    %v2565 = vand.u32 %v1491, 4294901760
    %2566 = vmatmul.mubr.f32.gmra.mrb[0].mxu0 %v2565
    %v2567 = vpop.f32.mrb[0].mxu0
    %v2568 = vadd.f32 %v2347, %v2567
    %v2569 = vpop.f32.mrb[0].mxu0
    %2570 = vmatprep.mubr.f32.mxu0 0.0
    %v2571 = vand.u32 %v1492, 4294901760
    %2572 = vmatmul.mubr.f32.gmra.mrb[0].mxu0 %v2571
    %v2573 = vpop.f32.mrb[0].mxu0
    %v2574 = vadd.f32 %v2355, %v2573
    %v2575 = vpop.f32.mrb[0].mxu0
    %2576 = vmatprep.mubr.f32.mxu0 0.0
    %v2577 = vand.u32 %v1493, 4294901760
    %2578 = vmatmul.mubr.f32.gmra.mrb[0].mxu0 %v2577
    %v2579 = vpop.f32.mrb[0].mxu0
    %v2580 = vadd.f32 %v2363, %v2579
    %v2581 = vpop.f32.mrb[0].mxu0
    %2582 = vmatprep.mubr.f32.mxu0 0.0
    %v2583 = vand.u32 %v1494, 4294901760
    %2584 = vmatmul.mubr.f32.gmra.mrb[0].mxu0 %v2583
    %v2585 = vpop.f32.mrb[0].mxu0
    %v2586 = vadd.f32 %v2371, %v2585
    %v2587 = vpop.f32.mrb[0].mxu0
    %2588 = vmatprep.mubr.f32.mxu0 0.0
    %v2589 = vand.u32 %v1495, 4294901760
    %2590 = vmatmul.mubr.f32.gmra.mrb[0].mxu0 %v2589
    %v2591 = vpop.f32.mrb[0].mxu0
    %v2592 = vadd.f32 %v2379, %v2591
    %v2593 = vpop.f32.mrb[0].mxu0
    %2594 = vmatprep.mubr.f32.mxu0 0.0
    %v2595 = vand.u32 %v1496, 4294901760
    %2596 = vmatmul.mubr.f32.gmra.mrb[0].mxu0 %v2595
    %v2597 = vpop.f32.mrb[0].mxu0
    %v2598 = vadd.f32 %v2387, %v2597
    %v2599 = vpop.f32.mrb[0].mxu0
    %2600 = vmatprep.mubr.f32.mxu0 0.0
    %v2601 = vand.u32 %v1497, 4294901760
    %2602 = vmatmul.mubr.f32.gmra.mrb[0].mxu0 %v2601
    %v2603 = vpop.f32.mrb[0].mxu0
    %v2604 = vadd.f32 %v2395, %v2603
    %v2605 = vpop.f32.mrb[0].mxu0
    %2606 = vdwg.mxu0
    %2607 = vmatprep.subr.mxu0 0.0
    %v2608 = vand.u32 %v164, 4294901760
    %2609 = vmatpush1.msra.mxu0 %v2608
    %2610 = vmatprep.subr.mxu0 0.0
    %v2611 = vand.u32 %v165, 4294901760
    %2612 = vmatpush1.msra.mxu0 %v2611
    %2613 = vmatprep.subr.mxu0 0.0
    %v2614 = vand.u32 %v166, 4294901760
    %2615 = vmatpush1.msra.mxu0 %v2614
    %2616 = vmatprep.subr.mxu0 0.0
    %v2617 = vand.u32 %v167, 4294901760
    %2618 = vmatpush1.msra.mxu0 %v2617
    %2619 = vmatprep.subr.mxu0 0.0
    %v2620 = vand.u32 %v168, 4294901760
    %2621 = vmatpush1.msra.mxu0 %v2620
    %2622 = vmatprep.subr.mxu0 0.0
    %v2623 = vand.u32 %v169, 4294901760
    %2624 = vmatpush1.msra.mxu0 %v2623
    %2625 = vmatprep.subr.mxu0 0.0
    %v2626 = vand.u32 %v170, 4294901760
    %2627 = vmatpush1.msra.mxu0 %v2626
    %2628 = vmatprep.subr.mxu0 0.0
    %v2629 = vand.u32 %v171, 4294901760
    %2630 = vmatpush1.msra.mxu0 %v2629
    %2631 = vmatprep.subr.mxu0 0.0
    %v2632 = vand.u32 %v172, 4294901760
    %2633 = vmatpush1.msra.mxu0 %v2632
    %2634 = vmatprep.subr.mxu0 0.0
    %v2635 = vand.u32 %v173, 4294901760
    %2636 = vmatpush1.msra.mxu0 %v2635
    %2637 = vmatprep.subr.mxu0 0.0
    %v2638 = vand.u32 %v174, 4294901760
    %2639 = vmatpush1.msra.mxu0 %v2638
    %2640 = vmatprep.subr.mxu0 0.0
    %v2641 = vand.u32 %v175, 4294901760
    %2642 = vmatpush1.msra.mxu0 %v2641
    %2643 = vmatprep.subr.mxu0 0.0
    %v2644 = vand.u32 %v176, 4294901760
    %2645 = vmatpush1.msra.mxu0 %v2644
    %2646 = vmatprep.subr.mxu0 0.0
    %v2647 = vand.u32 %v177, 4294901760
    %2648 = vmatpush1.msra.mxu0 %v2647
    %2649 = vmatprep.subr.mxu0 0.0
    %v2650 = vand.u32 %v178, 4294901760
    %2651 = vmatpush1.msra.mxu0 %v2650
    %2652 = vmatprep.subr.mxu0 0.0
    %v2653 = vand.u32 %v179, 4294901760
    %2654 = vmatpush1.msra.mxu0 %v2653
    %2655 = vmatprep.subr.mxu0 0.0
    %2656 = vmatpush1.msra.mxu0 0.0
    %2657 = vmatprep.subr.mxu0 0.0
    %2658 = vmatpush1.msra.mxu0 0.0
    %2659 = vmatprep.subr.mxu0 0.0
    %2660 = vmatpush1.msra.mxu0 0.0
    %2661 = vmatprep.subr.mxu0 0.0
    %2662 = vmatpush1.msra.mxu0 0.0
    %2663 = vmatprep.subr.mxu0 0.0
    %2664 = vmatpush1.msra.mxu0 0.0
    %2665 = vmatprep.subr.mxu0 0.0
    %2666 = vmatpush1.msra.mxu0 0.0
    %2667 = vmatprep.subr.mxu0 0.0
    %2668 = vmatpush1.msra.mxu0 0.0
    %2669 = vmatprep.subr.mxu0 0.0
    %2670 = vmatpush1.msra.mxu0 0.0
    %2671 = vmatprep.subr.mxu0 0.0
    %2672 = vmatpush1.msra.mxu0 0.0
    %2673 = vmatprep.subr.mxu0 0.0
    %2674 = vmatpush1.msra.mxu0 0.0
    %2675 = vmatprep.subr.mxu0 0.0
    %2676 = vmatpush1.msra.mxu0 0.0
    %2677 = vmatprep.subr.mxu0 0.0
    %2678 = vmatpush1.msra.mxu0 0.0
    %2679 = vmatprep.subr.mxu0 0.0
    %2680 = vmatpush1.msra.mxu0 0.0
    %2681 = vmatprep.subr.mxu0 0.0
    %2682 = vmatpush1.msra.mxu0 0.0
    %2683 = vmatprep.subr.mxu0 0.0
    %2684 = vmatpush1.msra.mxu0 0.0
    %2685 = vmatprep.subr.mxu0 0.0
    %2686 = vmatpush1.msra.mxu0 0.0
    %2687 = vmatprep.mubr.f32.mxu0 0.0
    %v2688 = vand.u32 %v1482, 4294901760
    %2689 = vmatmul.mubr.f32.gmra.mrb[0].mxu0 %v2688
    %v2690 = vpop.f32.mrb[0].mxu0
    %v2691 = vadd.f32 %v2514, %v2690
    %v2692 = vpop.f32.mrb[0].mxu0
    %2693 = vmatprep.mubr.f32.mxu0 0.0
    %v2694 = vand.u32 %v1483, 4294901760
    %2695 = vmatmul.mubr.f32.gmra.mrb[0].mxu0 %v2694
    %v2696 = vpop.f32.mrb[0].mxu0
    %v2697 = vadd.f32 %v2520, %v2696
    %v2698 = vpop.f32.mrb[0].mxu0
    %2699 = vmatprep.mubr.f32.mxu0 0.0
    %v2700 = vand.u32 %v1484, 4294901760
    %2701 = vmatmul.mubr.f32.gmra.mrb[0].mxu0 %v2700
    %v2702 = vpop.f32.mrb[0].mxu0
    %v2703 = vadd.f32 %v2526, %v2702
    %v2704 = vpop.f32.mrb[0].mxu0
    %2705 = vmatprep.mubr.f32.mxu0 0.0
    %v2706 = vand.u32 %v1485, 4294901760
    %2707 = vmatmul.mubr.f32.gmra.mrb[0].mxu0 %v2706
    %v2708 = vpop.f32.mrb[0].mxu0
    %v2709 = vadd.f32 %v2532, %v2708
    %v2710 = vpop.f32.mrb[0].mxu0
    %2711 = vmatprep.mubr.f32.mxu0 0.0
    %v2712 = vand.u32 %v1486, 4294901760
    %2713 = vmatmul.mubr.f32.gmra.mrb[0].mxu0 %v2712
    %v2714 = vpop.f32.mrb[0].mxu0
    %v2715 = vadd.f32 %v2538, %v2714
    %v2716 = vpop.f32.mrb[0].mxu0
    %2717 = vmatprep.mubr.f32.mxu0 0.0
    %v2718 = vand.u32 %v1487, 4294901760
    %2719 = vmatmul.mubr.f32.gmra.mrb[0].mxu0 %v2718
    %v2720 = vpop.f32.mrb[0].mxu0
    %v2721 = vadd.f32 %v2544, %v2720
    %v2722 = vpop.f32.mrb[0].mxu0
    %2723 = vmatprep.mubr.f32.mxu0 0.0
    %v2724 = vand.u32 %v1488, 4294901760
    %2725 = vmatmul.mubr.f32.gmra.mrb[0].mxu0 %v2724
    %v2726 = vpop.f32.mrb[0].mxu0
    %v2727 = vadd.f32 %v2550, %v2726
    %v2728 = vpop.f32.mrb[0].mxu0
    %2729 = vmatprep.mubr.f32.mxu0 0.0
    %v2730 = vand.u32 %v1489, 4294901760
    %2731 = vmatmul.mubr.f32.gmra.mrb[0].mxu0 %v2730
    %v2732 = vpop.f32.mrb[0].mxu0
    %v2733 = vadd.f32 %v2556, %v2732
    %v2734 = vpop.f32.mrb[0].mxu0
    %2735 = vmatprep.mubr.f32.mxu0 0.0
    %v2736 = vand.u32 %v1490, 4294901760
    %2737 = vmatmul.mubr.f32.gmra.mrb[0].mxu0 %v2736
    %v2738 = vpop.f32.mrb[0].mxu0
    %v2739 = vadd.f32 %v2562, %v2738
    %v2740 = vpop.f32.mrb[0].mxu0
    %2741 = vmatprep.mubr.f32.mxu0 0.0
    %v2742 = vand.u32 %v1491, 4294901760
    %2743 = vmatmul.mubr.f32.gmra.mrb[0].mxu0 %v2742
    %v2744 = vpop.f32.mrb[0].mxu0
    %v2745 = vadd.f32 %v2568, %v2744
    %v2746 = vpop.f32.mrb[0].mxu0
    %2747 = vmatprep.mubr.f32.mxu0 0.0
    %v2748 = vand.u32 %v1492, 4294901760
    %2749 = vmatmul.mubr.f32.gmra.mrb[0].mxu0 %v2748
    %v2750 = vpop.f32.mrb[0].mxu0
    %v2751 = vadd.f32 %v2574, %v2750
    %v2752 = vpop.f32.mrb[0].mxu0
    %2753 = vmatprep.mubr.f32.mxu0 0.0
    %v2754 = vand.u32 %v1493, 4294901760
    %2755 = vmatmul.mubr.f32.gmra.mrb[0].mxu0 %v2754
    %v2756 = vpop.f32.mrb[0].mxu0
    %v2757 = vadd.f32 %v2580, %v2756
    %v2758 = vpop.f32.mrb[0].mxu0
    %2759 = vmatprep.mubr.f32.mxu0 0.0
    %v2760 = vand.u32 %v1494, 4294901760
    %2761 = vmatmul.mubr.f32.gmra.mrb[0].mxu0 %v2760
    %v2762 = vpop.f32.mrb[0].mxu0
    %v2763 = vadd.f32 %v2586, %v2762
    %v2764 = vpop.f32.mrb[0].mxu0
    %2765 = vmatprep.mubr.f32.mxu0 0.0
    %v2766 = vand.u32 %v1495, 4294901760
    %2767 = vmatmul.mubr.f32.gmra.mrb[0].mxu0 %v2766
    %v2768 = vpop.f32.mrb[0].mxu0
    %v2769 = vadd.f32 %v2592, %v2768
    %v2770 = vpop.f32.mrb[0].mxu0
    %2771 = vmatprep.mubr.f32.mxu0 0.0
    %v2772 = vand.u32 %v1496, 4294901760
    %2773 = vmatmul.mubr.f32.gmra.mrb[0].mxu0 %v2772
    %v2774 = vpop.f32.mrb[0].mxu0
    %v2775 = vadd.f32 %v2598, %v2774
    %v2776 = vpop.f32.mrb[0].mxu0
    %2777 = vmatprep.mubr.f32.mxu0 0.0
    %v2778 = vand.u32 %v1497, 4294901760
    %2779 = vmatmul.mubr.f32.gmra.mrb[0].mxu0 %v2778
    %v2780 = vpop.f32.mrb[0].mxu0
    %v2781 = vadd.f32 %v2604, %v2780
    %v2782 = vpop.f32.mrb[0].mxu0
    %2783 = vdwg.mxu0
    %v2784 = vmul.f32 %v1389, %v2691
    %v2785 = vmul.f32 %v1395, %v2697
    %v2786 = vmul.f32 %v1401, %v2703
    %v2787 = vmul.f32 %v1407, %v2709
    %v2788 = vmul.f32 %v1413, %v2715
    %v2789 = vmul.f32 %v1419, %v2721
    %v2790 = vmul.f32 %v1425, %v2727
    %v2791 = vmul.f32 %v1431, %v2733
    %v2792 = vmul.f32 %v1437, %v2739
    %v2793 = vmul.f32 %v1443, %v2745
    %v2794 = vmul.f32 %v1449, %v2751
    %v2795 = vmul.f32 %v1455, %v2757
    %v2796 = vmul.f32 %v1461, %v2763
    %v2797 = vmul.f32 %v1467, %v2769
    %v2798 = vmul.f32 %v1473, %v2775
    %v2799 = vmul.f32 %v1479, %v2781
    %v2800 = vadd.f32 %v2784, %v2785
    %v2801 = vadd.f32 %v2800, %v2786
    %v2802 = vadd.f32 %v2801, %v2787
    %v2803 = vadd.f32 %v2802, %v2788
    %v2804 = vadd.f32 %v2803, %v2789
    %v2805 = vadd.f32 %v2804, %v2790
    %v2806 = vadd.f32 %v2805, %v2791
    %v2807 = vadd.f32 %v2806, %v2792
    %v2808 = vadd.f32 %v2807, %v2793
    %v2809 = vadd.f32 %v2808, %v2794
    %v2810 = vadd.f32 %v2809, %v2795
    %v2811 = vadd.f32 %v2810, %v2796
    %v2812 = vadd.f32 %v2811, %v2797
    %v2813 = vadd.f32 %v2812, %v2798
    %v2814 = vadd.f32 %v2813, %v2799
    %v2815 = vrot.slane %v2814, 4
    %v2816 = vadd.f32 %v2814, %v2815
    %v2817 = vrot.slane %v2816, 2
    %v2818 = vadd.f32 %v2816, %v2817
    %v2819 = vrot.slane %v2818, 1
    %v2820 = vadd.f32 %v2818, %v2819
    %2821 = vst [vmem:[#allocation8] sm:$0x1] %v2820
    // Predicated region
    $region30: #{tpu_custom_call.1} parent=1 // pred_check
      _
    $region31: #{tpu_custom_call.1} parent=1 // pred_check_branch
      %2823 = sbr.rel (0) target = $region33
    $region32: #{tpu_custom_call.1} parent=1 // pred_region
      %s2825 = ssub.s32 16, 16
      %2826 = vsyncadd [#allocation4], %s2825
      %s2828 = sshll.u32 [#allocation8], 4
      %s2829 = int_to_ptr.vmem [resolvable:$true] %s2828
      %2831 = dma.vmem_to_hbm [thread:$0]  %s2829, 16, %s4, [#allocation4]
    $region33: #{tpu_custom_call.1} parent=1 // pred_fallthru
      _
    // Predicated region
    $region34: #{tpu_custom_call.1} parent=1 // pred_check
      _
    $region35: #{tpu_custom_call.1} parent=1 // pred_check_branch
      %2833 = sbr.rel (0) target = $region37
    $region36: #{tpu_custom_call.1} parent=1 // pred_region
      %2834 = dma.done [#allocation4], 16
    $region37: #{tpu_custom_call.1} parent=1 // pred_fallthru
      _
    %2835 = vsyncpa [#allocation3], 1
    %2836 = vsyncpa [#allocation6], 1
    %2837 = vsyncpa [#allocation4], 1

</llo_original>
